<compile_context>
chip_gen: v5e
topology: v5e:2x2
jax: 0.10.0
libtpu: 0.0.40
codegen_flags: <defaults>
</compile_context>

<pallas_src>
import functools

import jax
import jax.numpy as jnp
from jax import lax
from jax.experimental import pallas as pl
from jax.experimental.pallas import tpu as pltpu


# ----------------------------------------------------------------------------
# Utilities
# ----------------------------------------------------------------------------
_VMEM_BUDGET_CACHE = None


def _vmem_budget_bytes():
    """~55% of this generation's per-core VMEM (v5e/v6e: 128 MiB, v7x: 64 MiB)."""
    global _VMEM_BUDGET_CACHE
    if _VMEM_BUDGET_CACHE is None:
        cap = None
        try:
            cap = getattr(pltpu.get_tpu_info(), "vmem_capacity_bytes", None)
        except Exception:
            cap = None
        if not cap:
            cap = 64 * 1024 * 1024  # conservative: v7x per-TensorCore VMEM
        _VMEM_BUDGET_CACHE = int(cap * 0.55)
    return _VMEM_BUDGET_CACHE


def _round_up(x, m):
    return ((x + m - 1) // m) * m


def _pick_dividing_tile(dim, candidates):
    """Largest candidate that evenly divides `dim`, else the full dim."""
    for c in candidates:
        if dim % c == 0:
            return c
    return dim


def _pick_padding_tile(dim, candidates):
    """Largest candidate <= dim (dim will be padded up to a multiple of it)."""
    for c in candidates:
        if c <= dim:
            return c
    return candidates[-1]


# ----------------------------------------------------------------------------
# Kernel 1: Conv1D / linear   out = x @ W + b
# ----------------------------------------------------------------------------
def _linear_resident_kernel(x_ref, w_ref, b_ref, o_ref):
    # Whole weight + bias resident in VMEM; single MXU pass per M tile.
    acc = jnp.dot(x_ref[...], w_ref[...], preferred_element_type=jnp.float32)
    o_ref[...] = (acc + b_ref[...].astype(jnp.float32)).astype(o_ref.dtype)


def _linear_tiled_kernel(x_ref, w_ref, b_ref, o_ref, acc_ref):
    @pl.when(pl.program_id(2) == 0)
    def _():
        acc_ref[...] = jnp.zeros_like(acc_ref)

    acc_ref[...] += jnp.dot(x_ref[...], w_ref[...],
                            preferred_element_type=jnp.float32)

    @pl.when(pl.program_id(2) == pl.num_programs(2) - 1)
    def _():
        o_ref[...] = (acc_ref[...] + b_ref[...].astype(jnp.float32)).astype(o_ref.dtype)


def linear_pallas(x, w, b):
    """x: [M, K], w: [K, N], b: [N] -> [M, N]."""
    M, K = x.shape
    N = w.shape[1]
    dtype = x.dtype
    itemsize = jnp.dtype(dtype).itemsize
    budget = _vmem_budget_bytes()

    tm = _pick_padding_tile(M, (512, 256, 128, 64, 32, 16, 8))
    M_pad = _round_up(M, tm)
    x_in = x if M_pad == M else jnp.pad(x, ((0, M_pad - M), (0, 0)))
    b2 = b.reshape(1, N)

    # Weight-resident path: a single HBM read of W, no K-axis accumulate pass.
    resident_bytes = (K * N + N) * itemsize + 2 * tm * (K + N) * itemsize
    if resident_bytes <= budget:
        out = pl.pallas_call(
            _linear_resident_kernel,
            grid=(M_pad // tm,),
            in_specs=[
                pl.BlockSpec((tm, K), lambda i: (i, 0)),
                pl.BlockSpec((K, N), lambda i: (0, 0)),   # resident weight
                pl.BlockSpec((1, N), lambda i: (0, 0)),   # resident bias
            ],
            out_specs=pl.BlockSpec((tm, N), lambda i: (i, 0)),
            out_shape=jax.ShapeDtypeStruct((M_pad, N), dtype),
            compiler_params=pltpu.CompilerParams(
                dimension_semantics=("parallel",),
                vmem_limit_bytes=budget),
            cost_estimate=pl.CostEstimate(
                flops=2 * M_pad * K * N, transcendentals=0,
                bytes_accessed=(M_pad * K + K * N + M_pad * N + N) * itemsize),
        )(x_in, w, b2)
    else:
        # Fallback for weights too large to keep resident: (M, N, K) tiling with
        # an f32 VMEM accumulator and init/finalize via pl.when.
        tn = _pick_dividing_tile(N, (512, 256, 128, 64, 32, 16, 8))
        tk = _pick_dividing_tile(K, (512, 256, 128, 64, 32, 16, 8))
        out = pl.pallas_call(
            _linear_tiled_kernel,
            grid=(M_pad // tm, N // tn, K // tk),
            in_specs=[
                pl.BlockSpec((tm, tk), lambda i, j, k: (i, k)),
                pl.BlockSpec((tk, tn), lambda i, j, k: (k, j)),
                pl.BlockSpec((1, tn), lambda i, j, k: (0, j)),
            ],
            out_specs=pl.BlockSpec((tm, tn), lambda i, j, k: (i, j)),
            out_shape=jax.ShapeDtypeStruct((M_pad, N), dtype),
            scratch_shapes=[pltpu.VMEM((tm, tn), jnp.float32)],
            compiler_params=pltpu.CompilerParams(
                dimension_semantics=("parallel", "parallel", "arbitrary"),
                vmem_limit_bytes=budget),
            cost_estimate=pl.CostEstimate(
                flops=2 * M_pad * K * N, transcendentals=0,
                bytes_accessed=(M_pad * K + K * N + M_pad * N + N) * itemsize),
        )(x_in, w, b2)

    return out if M_pad == M else out[:M]


# ----------------------------------------------------------------------------
# Kernel 2a: causal flash attention (hot path, no attn_weights output)
#   grid = (batch, head-group, query-tile); online softmax over KV tiles with
#   causal block-skip; writes the merged [B, S, E] output directly.
# ----------------------------------------------------------------------------
def _make_flash_attn_kernel(G, D, tq, tkv, scale):
    neg = float(jnp.finfo(jnp.float32).min)

    def kernel(q_ref, k_ref, v_ref, o_ref):
        qi = pl.program_id(2)
        q0 = qi * tq
        n_kv = qi + 1              # tkv == tq: KV tiles above the diagonal skipped

        head_outs = []
        for g in range(G):         # static unroll over heads in the group
            lo, hi = g * D, (g + 1) * D
            # fold 1/sqrt(D) into q (tq*D mults instead of tq*S)
            qg = q_ref[0, :, lo:hi].astype(jnp.float32) * scale      # (tq, D)

            def body(j, carry, lo=lo, hi=hi, qg=qg):
                m, l, acc = carry
                kv0 = pl.multiple_of(j * tkv, tkv)
                kj = k_ref[0, pl.ds(kv0, tkv), lo:hi]                 # (tkv, D)
                vj = v_ref[0, pl.ds(kv0, tkv), lo:hi]                 # (tkv, D)
                # QK^T without an explicit transpose: contract last dims.
                s = lax.dot_general(qg, kj.astype(jnp.float32),
                                    (((1,), (1,)), ((), ())),
                                    preferred_element_type=jnp.float32)  # (tq, tkv)
                row = q0 + lax.broadcasted_iota(jnp.int32, s.shape, 0)
                col = kv0 + lax.broadcasted_iota(jnp.int32, s.shape, 1)
                s = jnp.where(row >= col, s, neg)
                m_new = jnp.maximum(m, jnp.max(s, axis=-1, keepdims=True))
                alpha = jnp.exp(m - m_new)
                p = jnp.exp(s - m_new)
                l_new = alpha * l + jnp.sum(p, axis=-1, keepdims=True)
                acc_new = alpha * acc + jnp.dot(p.astype(vj.dtype), vj,
                                                preferred_element_type=jnp.float32)
                return m_new, l_new, acc_new

            m0 = jnp.full((tq, 1), neg, jnp.float32)
            l0 = jnp.zeros((tq, 1), jnp.float32)
            a0 = jnp.zeros((tq, D), jnp.float32)
            _, l, acc = lax.fori_loop(0, n_kv, body, (m0, l0, a0))
            head_outs.append(acc * pl.reciprocal(l, approx=True))

        # single lane-dense store of the merged (head-major) output tile
        o_ref[0] = jnp.concatenate(head_outs, axis=-1).astype(o_ref.dtype)

    return kernel


# ----------------------------------------------------------------------------
# Kernel 2b: attention with attn_weights output (non-hot path, full score slab,
# exact softmax so the weights match the reference bit-closely).
# ----------------------------------------------------------------------------
def _make_attn_weights_kernel(G, D, tq, scale):
    neg = float(jnp.finfo(jnp.float32).min)

    def kernel(q_ref, k_ref, v_ref, o_ref, w_ref):
        q0 = pl.program_id(2) * tq
        head_outs = []
        for g in range(G):
            lo, hi = g * D, (g + 1) * D
            qg = q_ref[0, :, lo:hi].astype(jnp.float32) * scale       # (tq, D)
            kg = k_ref[0, :, lo:hi]                                   # (S,  D)
            vg = v_ref[0, :, lo:hi]                                   # (S,  D)
            s = lax.dot_general(qg, kg.astype(jnp.float32),
                                (((1,), (1,)), ((), ())),
                                preferred_element_type=jnp.float32)   # (tq, S)
            row = q0 + lax.broadcasted_iota(jnp.int32, s.shape, 0)
            col = lax.broadcasted_iota(jnp.int32, s.shape, 1)
            s = jnp.where(row >= col, s, neg)
            m = jnp.max(s, axis=-1, keepdims=True)
            e = jnp.exp(s - m)
            p = e / jnp.sum(e, axis=-1, keepdims=True)
            w_ref[0, g] = p.astype(w_ref.dtype)
            head_outs.append(jnp.dot(p.astype(vg.dtype), vg,
                                     preferred_element_type=jnp.float32))
        o_ref[0] = jnp.concatenate(head_outs, axis=-1).astype(o_ref.dtype)

    return kernel


def attention_pallas(qkv, *, num_heads, output_attentions=False):
    """qkv: [B, S, 3E] (c_attn output) -> (merged attn_output [B, S, E],
    attn_weights [B, H, S, S] or None)."""
    B, S, threeE = qkv.shape
    E = threeE // 3
    H = num_heads
    D = E // H
    dtype = qkv.dtype
    itemsize = jnp.dtype(dtype).itemsize

    # Head grouping: aim for 128-lane-wide blocks fed straight from the fused
    # qkv tensor (real GPT-2: D=64 -> 2 heads/group). Otherwise fall back to a
    # single all-heads group on split q/k/v views (block width == E == full dim,
    # which always satisfies the (8,128) block rule).
    fused = (E % 128 == 0) and (128 % D == 0) and (H % (128 // D) == 0)
    G = (128 // D) if fused else H
    W = G * D
    n_groups = H // G

    tq = _pick_dividing_tile(S, (128, 64, 32, 16, 8))   # 128 cap keeps v5e happy
    tkv = tq
    grid = (B, n_groups, S // tq)

    if fused:
        srcs = (qkv, qkv, qkv)
        q_off, k_off, v_off = 0, E // W, 2 * (E // W)
    else:
        q, k, v = jnp.split(qkv, 3, axis=-1)             # slices, no transpose
        srcs = (q, k, v)
        q_off = k_off = v_off = 0

    q_spec = pl.BlockSpec((1, tq, W), lambda b, hg, qi: (b, qi, q_off + hg))
    k_spec = pl.BlockSpec((1, S, W), lambda b, hg, qi: (b, 0, k_off + hg))
    v_spec = pl.BlockSpec((1, S, W), lambda b, hg, qi: (b, 0, v_off + hg))
    o_spec = pl.BlockSpec((1, tq, W), lambda b, hg, qi: (b, qi, hg))

    scale = 1.0 / (float(D) ** 0.5)
    flops = 2 * B * H * S * S * D           # ~half the dense 4*B*H*S*S*D (causal skip)
    transcend = B * H * S * S // 2
    bytes_accessed = 4 * B * S * E * itemsize

    compiler_params = pltpu.CompilerParams(
        # (B, head-group) parallel -> megacore shards there; query axis arbitrary
        # so each core keeps its resident K/V block across query tiles.
        dimension_semantics=("parallel", "parallel", "arbitrary"),
        vmem_limit_bytes=_vmem_budget_bytes())

    if output_attentions:
        out = pl.pallas_call(
            _make_attn_weights_kernel(G, D, tq, scale),
            grid=grid,
            in_specs=[q_spec, k_spec, v_spec],
            out_specs=(o_spec,
                       pl.BlockSpec((1, G, tq, S), lambda b, hg, qi: (b, hg, qi, 0))),
            out_shape=(jax.ShapeDtypeStruct((B, S, E), dtype),
                       jax.ShapeDtypeStruct((B, H, S, S), dtype)),
            compiler_params=compiler_params,
            cost_estimate=pl.CostEstimate(
                flops=2 * flops, transcendentals=2 * transcend,
                bytes_accessed=bytes_accessed + B * H * S * S * itemsize),
        )(*srcs)
        return out[0], out[1]

    out = pl.pallas_call(
        _make_flash_attn_kernel(G, D, tq, tkv, scale),
        grid=grid,
        in_specs=[q_spec, k_spec, v_spec],
        out_specs=o_spec,
        out_shape=jax.ShapeDtypeStruct((B, S, E), dtype),
        compiler_params=compiler_params,
        cost_estimate=pl.CostEstimate(flops=flops, transcendentals=transcend,
                                      bytes_accessed=bytes_accessed),
    )(*srcs)
    return out, None


# ----------------------------------------------------------------------------
# Full module forward (glue in plain JAX, hot paths in Pallas)
# ----------------------------------------------------------------------------
@functools.partial(jax.jit, static_argnames=("num_heads", "output_attentions"))
def gpt2_attention_forward(hidden_states, c_attn_w, c_attn_b, c_proj_w, c_proj_b,
                           num_heads, output_attentions=False):
    B, S, E = hidden_states.shape

    # c_attn: [B*S, E] @ [E, 3E] + [3E]
    qkv = linear_pallas(hidden_states.reshape(B * S, E),
                        c_attn_w, c_attn_b).reshape(B, S, 3 * E)

    # attention consumes the fused qkv and emits the merged [B, S, E] output
    attn_out, attn_weights = attention_pallas(qkv, num_heads=num_heads,
                                              output_attentions=output_attentions)

    # c_proj (+ resid_dropout = eval-mode identity)
    out = linear_pallas(attn_out.reshape(B * S, E), c_proj_w, c_proj_b).reshape(B, S, E)
    return out, attn_weights


# ----------------------------------------------------------------------------
# Pure-JAX reference for verification
# ----------------------------------------------------------------------------
def gpt2_attention_reference(hidden_states, c_attn_w, c_attn_b, c_proj_w, c_proj_b,
                             num_heads):
    B, S, E = hidden_states.shape
    D = E // num_heads
    qkv = hidden_states @ c_attn_w + c_attn_b
    query, key, value = jnp.split(qkv, 3, axis=-1)

    def split_heads(t):
        return t.reshape(B, S, num_heads, D).transpose(0, 2, 1, 3)

    q, k, v = split_heads(query), split_heads(key), split_heads(value)
    s = jnp.einsum("bhqd,bhkd->bhqk", q, k) / (float(D) ** 0.5)
    causal = jnp.tril(jnp.ones((S, S), dtype=bool))[None, None]
    s = jnp.where(causal, s, jnp.finfo(s.dtype).min)
    p = jax.nn.softmax(s, axis=-1)
    o = jnp.einsum("bhqk,bhkd->bhqd", p, v)
    merged = o.transpose(0, 2, 1, 3).reshape(B, S, E)
    return merged @ c_proj_w + c_proj_b, p


# ----------------------------------------------------------------------------
if __name__ == "__main__":
    # Small GPT-2-like config: hidden_size=32, num_heads=4, head_dim=8, seq=8, batch=2
    B, S, E, H = 2, 8, 32, 4

    key = jax.random.PRNGKey(0)
    k1, k2, k3 = jax.random.split(key, 3)

    hidden_states = jax.random.normal(k1, (B, S, E), dtype=jnp.float32)
    # GPT-2 Conv1D weights: shape (in_features, out_features), init normal(0, 0.02)
    c_attn_w = 0.02 * jax.random.normal(k2, (E, 3 * E), dtype=jnp.float32)
    c_attn_b = jnp.zeros((3 * E,), dtype=jnp.float32)
    c_proj_w = 0.02 * jax.random.normal(k3, (E, E), dtype=jnp.float32)
    c_proj_b = jnp.zeros((E,), dtype=jnp.float32)

    # Path with attention weights (output_attentions=True): exact softmax kernel.
    out, attn_w = gpt2_attention_forward(
        hidden_states, c_attn_w, c_attn_b, c_proj_w, c_proj_b,
        num_heads=H, output_attentions=True)
    out = jax.block_until_ready(out)
    attn_w = jax.block_until_ready(attn_w)

    # Hot path: causal flash kernel, no O(S^2) weights write, approx reciprocal.
    out_fast, none_w = gpt2_attention_forward(
        hidden_states, c_attn_w, c_attn_b, c_proj_w, c_proj_b,
        num_heads=H, output_attentions=False)
    out_fast = jax.block_until_ready(out_fast)

    ref_out, ref_w = gpt2_attention_reference(
        hidden_states, c_attn_w, c_attn_b, c_proj_w, c_proj_b, num_heads=H)

    assert out.shape == (B, S, E)
    assert attn_w.shape == (B, H, S, S)
    assert none_w is None
    assert jnp.allclose(out, ref_out, atol=1e-5, rtol=1e-5)
    assert jnp.allclose(attn_w, ref_w, atol=1e-5, rtol=1e-5)
    # hot path uses pl.reciprocal(approx=True) + online softmax -> looser tolerance
    assert jnp.allclose(out_fast, ref_out, atol=1e-4, rtol=1e-3)

    print("KERNEL_OK")
</pallas_src>

<mosaic_0001>
module attributes {stable_mosaic.version = 11 : i64} {
  func.func @_linear_resident_kernel(%arg0: i32, %arg1: memref<16x32xf32, #tpu.memory_space<vmem>>, %arg2: memref<32x32xf32, #tpu.memory_space<vmem>>, %arg3: memref<1x32xf32, #tpu.memory_space<vmem>>, %arg4: memref<16x32xf32, #tpu.memory_space<vmem>>) attributes {dimension_semantics = [#tpu.dimension_semantics<parallel>], iteration_bounds = array<i64: 1>, scalar_prefetch = 0 : i64, scratch_operands = 0 : i64, tpu.core_type = #tpu.core_type<tc>, window_params = [{transform_indices = @transform_0, window_bounds = array<i64: 16, 32>}, {pipeline_mode = #tpu.pipeline_mode<synchronous>, transform_indices = @transform_1, window_bounds = array<i64: 32, 32>}, {pipeline_mode = #tpu.pipeline_mode<synchronous>, transform_indices = @transform_2, window_bounds = array<i64: 1, 32>}, {transform_indices = @transform_3, window_bounds = array<i64: 16, 32>}]} {
    %c0 = arith.constant 0 : index
    %c0_0 = arith.constant 0 : index
    %0 = vector.load %arg1[%c0, %c0_0] : memref<16x32xf32, #tpu.memory_space<vmem>>, vector<16x32xf32>
    %c0_1 = arith.constant 0 : index
    %c0_2 = arith.constant 0 : index
    %1 = vector.load %arg2[%c0_1, %c0_2] : memref<32x32xf32, #tpu.memory_space<vmem>>, vector<32x32xf32>
    %cst = arith.constant dense<0.000000e+00> : vector<16x32xf32>
    %2 = tpu.matmul %0, %1, %cst {dimension_numbers = #tpu.dot_dimension_numbers<[1], [0], [0], [1], [0, 0, 1, 1], [], []>} : vector<16x32xf32>, vector<32x32xf32>, vector<16x32xf32> -> vector<16x32xf32>
    %c0_3 = arith.constant 0 : index
    %c0_4 = arith.constant 0 : index
    %3 = vector.load %arg3[%c0_3, %c0_4] : memref<1x32xf32, #tpu.memory_space<vmem>>, vector<1x32xf32>
    %4 = vector.broadcast %3 : vector<1x32xf32> to vector<16x32xf32>
    %5 = arith.addf %2, %4 : vector<16x32xf32>
    %c0_5 = arith.constant 0 : index
    %c0_6 = arith.constant 0 : index
    %6 = vector.load %arg4[%c0_5, %c0_6] : memref<16x32xf32, #tpu.memory_space<vmem>>, vector<16x32xf32>
    tpu.vector_store %arg4[%c0_5, %c0_6], %5 {strides = array<i32>} : memref<16x32xf32, #tpu.memory_space<vmem>>, vector<16x32xf32>,
    return
  }
  func.func @transform_0(%arg0: i32) -> (i32, i32) {
    %c0_i32 = arith.constant 0 : i32
    %c0_i32_0 = arith.constant 0 : i32
    return %arg0, %c0_i32 : i32, i32
  }
  func.func @transform_1(%arg0: i32) -> (i32, i32) {
    %c0_i32 = arith.constant 0 : i32
    %c0_i32_0 = arith.constant 0 : i32
    %c0_i32_1 = arith.constant 0 : i32
    return %c0_i32, %c0_i32_0 : i32, i32
  }
  func.func @transform_2(%arg0: i32) -> (i32, i32) {
    %c0_i32 = arith.constant 0 : i32
    %c0_i32_0 = arith.constant 0 : i32
    %c0_i32_1 = arith.constant 0 : i32
    return %c0_i32, %c0_i32_0 : i32, i32
  }
  func.func @transform_3(%arg0: i32) -> (i32, i32) {
    %c0_i32 = arith.constant 0 : i32
    %c0_i32_0 = arith.constant 0 : i32
    return %arg0, %c0_i32 : i32, i32
  }
}

module attributes {stable_mosaic.version = 11 : i64} {
  func.func @_linear_resident_kernel(%arg0: i32, %arg1: memref<16x32xf32, #tpu.memory_space<vmem>>, %arg2: memref<32x96xf32, #tpu.memory_space<vmem>>, %arg3: memref<1x96xf32, #tpu.memory_space<vmem>>, %arg4: memref<16x96xf32, #tpu.memory_space<vmem>>) attributes {dimension_semantics = [#tpu.dimension_semantics<parallel>], iteration_bounds = array<i64: 1>, scalar_prefetch = 0 : i64, scratch_operands = 0 : i64, tpu.core_type = #tpu.core_type<tc>, window_params = [{transform_indices = @transform_0, window_bounds = array<i64: 16, 32>}, {pipeline_mode = #tpu.pipeline_mode<synchronous>, transform_indices = @transform_1, window_bounds = array<i64: 32, 96>}, {pipeline_mode = #tpu.pipeline_mode<synchronous>, transform_indices = @transform_2, window_bounds = array<i64: 1, 96>}, {transform_indices = @transform_3, window_bounds = array<i64: 16, 96>}]} {
    %c0 = arith.constant 0 : index
    %c0_0 = arith.constant 0 : index
    %0 = vector.load %arg1[%c0, %c0_0] : memref<16x32xf32, #tpu.memory_space<vmem>>, vector<16x32xf32>
    %c0_1 = arith.constant 0 : index
    %c0_2 = arith.constant 0 : index
    %1 = vector.load %arg2[%c0_1, %c0_2] : memref<32x96xf32, #tpu.memory_space<vmem>>, vector<32x96xf32>
    %cst = arith.constant dense<0.000000e+00> : vector<16x96xf32>
    %2 = tpu.matmul %0, %1, %cst {dimension_numbers = #tpu.dot_dimension_numbers<[1], [0], [0], [1], [0, 0, 1, 1], [], []>} : vector<16x32xf32>, vector<32x96xf32>, vector<16x96xf32> -> vector<16x96xf32>
    %c0_3 = arith.constant 0 : index
    %c0_4 = arith.constant 0 : index
    %3 = vector.load %arg3[%c0_3, %c0_4] : memref<1x96xf32, #tpu.memory_space<vmem>>, vector<1x96xf32>
    %4 = vector.broadcast %3 : vector<1x96xf32> to vector<16x96xf32>
    %5 = arith.addf %2, %4 : vector<16x96xf32>
    %c0_5 = arith.constant 0 : index
    %c0_6 = arith.constant 0 : index
    %6 = vector.load %arg4[%c0_5, %c0_6] : memref<16x96xf32, #tpu.memory_space<vmem>>, vector<16x96xf32>
    tpu.vector_store %arg4[%c0_5, %c0_6], %5 {strides = array<i32>} : memref<16x96xf32, #tpu.memory_space<vmem>>, vector<16x96xf32>,
    return
  }
  func.func @transform_0(%arg0: i32) -> (i32, i32) {
    %c0_i32 = arith.constant 0 : i32
    %c0_i32_0 = arith.constant 0 : i32
    return %arg0, %c0_i32 : i32, i32
  }
  func.func @transform_1(%arg0: i32) -> (i32, i32) {
    %c0_i32 = arith.constant 0 : i32
    %c0_i32_0 = arith.constant 0 : i32
    %c0_i32_1 = arith.constant 0 : i32
    return %c0_i32, %c0_i32_0 : i32, i32
  }
  func.func @transform_2(%arg0: i32) -> (i32, i32) {
    %c0_i32 = arith.constant 0 : i32
    %c0_i32_0 = arith.constant 0 : i32
    %c0_i32_1 = arith.constant 0 : i32
    return %c0_i32, %c0_i32_0 : i32, i32
  }
  func.func @transform_3(%arg0: i32) -> (i32, i32) {
    %c0_i32 = arith.constant 0 : i32
    %c0_i32_0 = arith.constant 0 : i32
    return %arg0, %c0_i32 : i32, i32
  }
}

module attributes {stable_mosaic.version = 11 : i64} {
  func.func @kernel(%arg0: i32, %arg1: i32, %arg2: i32, %arg3: memref<1x8x32xf32, #tpu.memory_space<vmem>>, %arg4: memref<1x8x32xf32, #tpu.memory_space<vmem>>, %arg5: memref<1x8x32xf32, #tpu.memory_space<vmem>>, %arg6: memref<1x8x32xf32, #tpu.memory_space<vmem>>, %arg7: memref<1x4x8x8xf32, #tpu.memory_space<vmem>>) attributes {dimension_semantics = [#tpu.dimension_semantics<parallel>, #tpu.dimension_semantics<parallel>, #tpu.dimension_semantics<arbitrary>], iteration_bounds = array<i64: 2, 1, 1>, scalar_prefetch = 0 : i64, scratch_operands = 0 : i64, tpu.core_type = #tpu.core_type<tc>, window_params = [{transform_indices = @transform_0, window_bounds = array<i64: 1, 8, 32>}, {transform_indices = @transform_1, window_bounds = array<i64: 1, 8, 32>}, {transform_indices = @transform_2, window_bounds = array<i64: 1, 8, 32>}, {transform_indices = @transform_3, window_bounds = array<i64: 1, 8, 32>}, {transform_indices = @transform_4, window_bounds = array<i64: 1, 4, 8, 8>}]} {
    %c8_i32 = arith.constant 8 : i32
    %0 = arith.muli %arg2, %c8_i32 : i32
    %c0 = arith.constant 0 : index
    %c0_0 = arith.constant 0 : index
    %c0_1 = arith.constant 0 : index
    %1 = vector.load %arg3[%c0, %c0_0, %c0_1] : memref<1x8x32xf32, #tpu.memory_space<vmem>>, vector<1x8x8xf32>
    %2 = vector.shape_cast %1 : vector<1x8x8xf32> to vector<8x8xf32>
    %cst = arith.constant 0.353553385 : f32
    %3 = vector.broadcast %cst : f32 to vector<8x8xf32>
    %4 = arith.mulf %2, %3 : vector<8x8xf32>
    %c0_2 = arith.constant 0 : index
    %c0_3 = arith.constant 0 : index
    %c0_4 = arith.constant 0 : index
    %5 = vector.load %arg4[%c0_2, %c0_3, %c0_4] : memref<1x8x32xf32, #tpu.memory_space<vmem>>, vector<1x8x8xf32>
    %6 = vector.shape_cast %5 : vector<1x8x8xf32> to vector<8x8xf32>
    %c0_5 = arith.constant 0 : index
    %c0_6 = arith.constant 0 : index
    %c0_7 = arith.constant 0 : index
    %7 = vector.load %arg5[%c0_5, %c0_6, %c0_7] : memref<1x8x32xf32, #tpu.memory_space<vmem>>, vector<1x8x8xf32>
    %8 = vector.shape_cast %7 : vector<1x8x8xf32> to vector<8x8xf32>
    %cst_8 = arith.constant dense<0.000000e+00> : vector<8x8xf32>
    %9 = tpu.matmul %4, %6, %cst_8 {dimension_numbers = #tpu.dot_dimension_numbers<[1], [1], [0], [0], [0, 0, 1, 0], [], []>} : vector<8x8xf32>, vector<8x8xf32>, vector<8x8xf32> -> vector<8x8xf32>
    %10 = tpu.iota {dimensions = array<i32: 0>} : vector<8x8xi32>
    %11 = vector.broadcast %0 : i32 to vector<8x8xi32>
    %12 = arith.addi %11, %10 : vector<8x8xi32>
    %13 = tpu.iota {dimensions = array<i32: 1>} : vector<8x8xi32>
    %14 = arith.cmpi sge, %12, %13 : vector<8x8xi32>
    %cst_9 = arith.constant -3.40282347E+38 : f32
    %15 = vector.broadcast %cst_9 : f32 to vector<8x8xf32>
    %16 = arith.select %14, %9, %15 : vector<8x8xi1>, vector<8x8xf32>
    %cst_10 = arith.constant dense<0xFF800000> : vector<8xf32>
    %17 = vector.multi_reduction <maximumf>, %16, %cst_10 [1] : vector<8x8xf32> to vector<8xf32>
    %18 = vector.shape_cast %17 : vector<8xf32> to vector<8x1xf32>
    %19 = vector.broadcast %18 : vector<8x1xf32> to vector<8x8xf32>
    %20 = arith.subf %16, %19 : vector<8x8xf32>
    %21 = math.exp %20 : vector<8x8xf32>
    %cst_11 = arith.constant dense<0.000000e+00> : vector<8xf32>
    %22 = vector.multi_reduction <add>, %21, %cst_11 [1] : vector<8x8xf32> to vector<8xf32>
    %23 = vector.shape_cast %22 : vector<8xf32> to vector<8x1xf32>
    %24 = vector.broadcast %23 : vector<8x1xf32> to vector<8x8xf32>
    %25 = arith.divf %21, %24 : vector<8x8xf32>
    %c0_12 = arith.constant 0 : index
    %c0_13 = arith.constant 0 : index
    %c0_14 = arith.constant 0 : index
    %c0_15 = arith.constant 0 : index
    %26 = vector.load %arg7[%c0_12, %c0_13, %c0_14, %c0_15] : memref<1x4x8x8xf32, #tpu.memory_space<vmem>>, vector<1x1x8x8xf32>
    %27 = vector.shape_cast %26 : vector<1x1x8x8xf32> to vector<8x8xf32>
    %28 = vector.shape_cast %25 : vector<8x8xf32> to vector<1x1x8x8xf32>
    tpu.vector_store %arg7[%c0_12, %c0_13, %c0_14, %c0_15], %28 {strides = array<i32>} : memref<1x4x8x8xf32, #tpu.memory_space<vmem>>, vector<1x1x8x8xf32>,
    %cst_16 = arith.constant dense<0.000000e+00> : vector<8x8xf32>
    %29 = tpu.matmul %25, %8, %cst_16 {dimension_numbers = #tpu.dot_dimension_numbers<[1], [0], [0], [1], [0, 0, 1, 1], [], []>} : vector<8x8xf32>, vector<8x8xf32>, vector<8x8xf32> -> vector<8x8xf32>
    %c0_17 = arith.constant 0 : index
    %c0_18 = arith.constant 0 : index
    %c8 = arith.constant 8 : index
    %30 = vector.load %arg3[%c0_17, %c0_18, %c8] : memref<1x8x32xf32, #tpu.memory_space<vmem>>, vector<1x8x8xf32>
    %31 = vector.shape_cast %30 : vector<1x8x8xf32> to vector<8x8xf32>
    %cst_19 = arith.constant 0.353553385 : f32
    %32 = vector.broadcast %cst_19 : f32 to vector<8x8xf32>
    %33 = arith.mulf %31, %32 : vector<8x8xf32>
    %c0_20 = arith.constant 0 : index
    %c0_21 = arith.constant 0 : index
    %c8_22 = arith.constant 8 : index
    %34 = vector.load %arg4[%c0_20, %c0_21, %c8_22] : memref<1x8x32xf32, #tpu.memory_space<vmem>>, vector<1x8x8xf32>
    %35 = vector.shape_cast %34 : vector<1x8x8xf32> to vector<8x8xf32>
    %c0_23 = arith.constant 0 : index
    %c0_24 = arith.constant 0 : index
    %c8_25 = arith.constant 8 : index
    %36 = vector.load %arg5[%c0_23, %c0_24, %c8_25] : memref<1x8x32xf32, #tpu.memory_space<vmem>>, vector<1x8x8xf32>
    %37 = vector.shape_cast %36 : vector<1x8x8xf32> to vector<8x8xf32>
    %cst_26 = arith.constant dense<0.000000e+00> : vector<8x8xf32>
    %38 = tpu.matmul %33, %35, %cst_26 {dimension_numbers = #tpu.dot_dimension_numbers<[1], [1], [0], [0], [0, 0, 1, 0], [], []>} : vector<8x8xf32>, vector<8x8xf32>, vector<8x8xf32> -> vector<8x8xf32>
    %39 = tpu.iota {dimensions = array<i32: 0>} : vector<8x8xi32>
    %40 = vector.broadcast %0 : i32 to vector<8x8xi32>
    %41 = arith.addi %40, %39 : vector<8x8xi32>
    %42 = tpu.iota {dimensions = array<i32: 1>} : vector<8x8xi32>
    %43 = arith.cmpi sge, %41, %42 : vector<8x8xi32>
    %cst_27 = arith.constant -3.40282347E+38 : f32
    %44 = vector.broadcast %cst_27 : f32 to vector<8x8xf32>
    %45 = arith.select %43, %38, %44 : vector<8x8xi1>, vector<8x8xf32>
    %cst_28 = arith.constant dense<0xFF800000> : vector<8xf32>
    %46 = vector.multi_reduction <maximumf>, %45, %cst_28 [1] : vector<8x8xf32> to vector<8xf32>
    %47 = vector.shape_cast %46 : vector<8xf32> to vector<8x1xf32>
    %48 = vector.broadcast %47 : vector<8x1xf32> to vector<8x8xf32>
    %49 = arith.subf %45, %48 : vector<8x8xf32>
    %50 = math.exp %49 : vector<8x8xf32>
    %cst_29 = arith.constant dense<0.000000e+00> : vector<8xf32>
    %51 = vector.multi_reduction <add>, %50, %cst_29 [1] : vector<8x8xf32> to vector<8xf32>
    %52 = vector.shape_cast %51 : vector<8xf32> to vector<8x1xf32>
    %53 = vector.broadcast %52 : vector<8x1xf32> to vector<8x8xf32>
    %54 = arith.divf %50, %53 : vector<8x8xf32>
    %c0_30 = arith.constant 0 : index
    %c1 = arith.constant 1 : index
    %c0_31 = arith.constant 0 : index
    %c0_32 = arith.constant 0 : index
    %55 = vector.load %arg7[%c0_30, %c1, %c0_31, %c0_32] : memref<1x4x8x8xf32, #tpu.memory_space<vmem>>, vector<1x1x8x8xf32>
    %56 = vector.shape_cast %55 : vector<1x1x8x8xf32> to vector<8x8xf32>
    %57 = vector.shape_cast %54 : vector<8x8xf32> to vector<1x1x8x8xf32>
    tpu.vector_store %arg7[%c0_30, %c1, %c0_31, %c0_32], %57 {strides = array<i32>} : memref<1x4x8x8xf32, #tpu.memory_space<vmem>>, vector<1x1x8x8xf32>,
    %cst_33 = arith.constant dense<0.000000e+00> : vector<8x8xf32>
    %58 = tpu.matmul %54, %37, %cst_33 {dimension_numbers = #tpu.dot_dimension_numbers<[1], [0], [0], [1], [0, 0, 1, 1], [], []>} : vector<8x8xf32>, vector<8x8xf32>, vector<8x8xf32> -> vector<8x8xf32>
    %c0_34 = arith.constant 0 : index
    %c0_35 = arith.constant 0 : index
    %c16 = arith.constant 16 : index
    %59 = vector.load %arg3[%c0_34, %c0_35, %c16] : memref<1x8x32xf32, #tpu.memory_space<vmem>>, vector<1x8x8xf32>
    %60 = vector.shape_cast %59 : vector<1x8x8xf32> to vector<8x8xf32>
    %cst_36 = arith.constant 0.353553385 : f32
    %61 = vector.broadcast %cst_36 : f32 to vector<8x8xf32>
    %62 = arith.mulf %60, %61 : vector<8x8xf32>
    %c0_37 = arith.constant 0 : index
    %c0_38 = arith.constant 0 : index
    %c16_39 = arith.constant 16 : index
    %63 = vector.load %arg4[%c0_37, %c0_38, %c16_39] : memref<1x8x32xf32, #tpu.memory_space<vmem>>, vector<1x8x8xf32>
    %64 = vector.shape_cast %63 : vector<1x8x8xf32> to vector<8x8xf32>
    %c0_40 = arith.constant 0 : index
    %c0_41 = arith.constant 0 : index
    %c16_42 = arith.constant 16 : index
    %65 = vector.load %arg5[%c0_40, %c0_41, %c16_42] : memref<1x8x32xf32, #tpu.memory_space<vmem>>, vector<1x8x8xf32>
    %66 = vector.shape_cast %65 : vector<1x8x8xf32> to vector<8x8xf32>
    %cst_43 = arith.constant dense<0.000000e+00> : vector<8x8xf32>
    %67 = tpu.matmul %62, %64, %cst_43 {dimension_numbers = #tpu.dot_dimension_numbers<[1], [1], [0], [0], [0, 0, 1, 0], [], []>} : vector<8x8xf32>, vector<8x8xf32>, vector<8x8xf32> -> vector<8x8xf32>
    %68 = tpu.iota {dimensions = array<i32: 0>} : vector<8x8xi32>
    %69 = vector.broadcast %0 : i32 to vector<8x8xi32>
    %70 = arith.addi %69, %68 : vector<8x8xi32>
    %71 = tpu.iota {dimensions = array<i32: 1>} : vector<8x8xi32>
    %72 = arith.cmpi sge, %70, %71 : vector<8x8xi32>
    %cst_44 = arith.constant -3.40282347E+38 : f32
    %73 = vector.broadcast %cst_44 : f32 to vector<8x8xf32>
    %74 = arith.select %72, %67, %73 : vector<8x8xi1>, vector<8x8xf32>
    %cst_45 = arith.constant dense<0xFF800000> : vector<8xf32>
    %75 = vector.multi_reduction <maximumf>, %74, %cst_45 [1] : vector<8x8xf32> to vector<8xf32>
    %76 = vector.shape_cast %75 : vector<8xf32> to vector<8x1xf32>
    %77 = vector.broadcast %76 : vector<8x1xf32> to vector<8x8xf32>
    %78 = arith.subf %74, %77 : vector<8x8xf32>
    %79 = math.exp %78 : vector<8x8xf32>
    %cst_46 = arith.constant dense<0.000000e+00> : vector<8xf32>
    %80 = vector.multi_reduction <add>, %79, %cst_46 [1] : vector<8x8xf32> to vector<8xf32>
    %81 = vector.shape_cast %80 : vector<8xf32> to vector<8x1xf32>
    %82 = vector.broadcast %81 : vector<8x1xf32> to vector<8x8xf32>
    %83 = arith.divf %79, %82 : vector<8x8xf32>
    %c0_47 = arith.constant 0 : index
    %c2 = arith.constant 2 : index
    %c0_48 = arith.constant 0 : index
    %c0_49 = arith.constant 0 : index
    %84 = vector.load %arg7[%c0_47, %c2, %c0_48, %c0_49] : memref<1x4x8x8xf32, #tpu.memory_space<vmem>>, vector<1x1x8x8xf32>
    %85 = vector.shape_cast %84 : vector<1x1x8x8xf32> to vector<8x8xf32>
    %86 = vector.shape_cast %83 : vector<8x8xf32> to vector<1x1x8x8xf32>
    tpu.vector_store %arg7[%c0_47, %c2, %c0_48, %c0_49], %86 {strides = array<i32>} : memref<1x4x8x8xf32, #tpu.memory_space<vmem>>, vector<1x1x8x8xf32>,
    %cst_50 = arith.constant dense<0.000000e+00> : vector<8x8xf32>
    %87 = tpu.matmul %83, %66, %cst_50 {dimension_numbers = #tpu.dot_dimension_numbers<[1], [0], [0], [1], [0, 0, 1, 1], [], []>} : vector<8x8xf32>, vector<8x8xf32>, vector<8x8xf32> -> vector<8x8xf32>
    %c0_51 = arith.constant 0 : index
    %c0_52 = arith.constant 0 : index
    %c24 = arith.constant 24 : index
    %88 = vector.load %arg3[%c0_51, %c0_52, %c24] : memref<1x8x32xf32, #tpu.memory_space<vmem>>, vector<1x8x8xf32>
    %89 = vector.shape_cast %88 : vector<1x8x8xf32> to vector<8x8xf32>
    %cst_53 = arith.constant 0.353553385 : f32
    %90 = vector.broadcast %cst_53 : f32 to vector<8x8xf32>
    %91 = arith.mulf %89, %90 : vector<8x8xf32>
    %c0_54 = arith.constant 0 : index
    %c0_55 = arith.constant 0 : index
    %c24_56 = arith.constant 24 : index
    %92 = vector.load %arg4[%c0_54, %c0_55, %c24_56] : memref<1x8x32xf32, #tpu.memory_space<vmem>>, vector<1x8x8xf32>
    %93 = vector.shape_cast %92 : vector<1x8x8xf32> to vector<8x8xf32>
    %c0_57 = arith.constant 0 : index
    %c0_58 = arith.constant 0 : index
    %c24_59 = arith.constant 24 : index
    %94 = vector.load %arg5[%c0_57, %c0_58, %c24_59] : memref<1x8x32xf32, #tpu.memory_space<vmem>>, vector<1x8x8xf32>
    %95 = vector.shape_cast %94 : vector<1x8x8xf32> to vector<8x8xf32>
    %cst_60 = arith.constant dense<0.000000e+00> : vector<8x8xf32>
    %96 = tpu.matmul %91, %93, %cst_60 {dimension_numbers = #tpu.dot_dimension_numbers<[1], [1], [0], [0], [0, 0, 1, 0], [], []>} : vector<8x8xf32>, vector<8x8xf32>, vector<8x8xf32> -> vector<8x8xf32>
    %97 = tpu.iota {dimensions = array<i32: 0>} : vector<8x8xi32>
    %98 = vector.broadcast %0 : i32 to vector<8x8xi32>
    %99 = arith.addi %98, %97 : vector<8x8xi32>
    %100 = tpu.iota {dimensions = array<i32: 1>} : vector<8x8xi32>
    %101 = arith.cmpi sge, %99, %100 : vector<8x8xi32>
    %cst_61 = arith.constant -3.40282347E+38 : f32
    %102 = vector.broadcast %cst_61 : f32 to vector<8x8xf32>
    %103 = arith.select %101, %96, %102 : vector<8x8xi1>, vector<8x8xf32>
    %cst_62 = arith.constant dense<0xFF800000> : vector<8xf32>
    %104 = vector.multi_reduction <maximumf>, %103, %cst_62 [1] : vector<8x8xf32> to vector<8xf32>
    %105 = vector.shape_cast %104 : vector<8xf32> to vector<8x1xf32>
    %106 = vector.broadcast %105 : vector<8x1xf32> to vector<8x8xf32>
    %107 = arith.subf %103, %106 : vector<8x8xf32>
    %108 = math.exp %107 : vector<8x8xf32>
    %cst_63 = arith.constant dense<0.000000e+00> : vector<8xf32>
    %109 = vector.multi_reduction <add>, %108, %cst_63 [1] : vector<8x8xf32> to vector<8xf32>
    %110 = vector.shape_cast %109 : vector<8xf32> to vector<8x1xf32>
    %111 = vector.broadcast %110 : vector<8x1xf32> to vector<8x8xf32>
    %112 = arith.divf %108, %111 : vector<8x8xf32>
    %c0_64 = arith.constant 0 : index
    %c3 = arith.constant 3 : index
    %c0_65 = arith.constant 0 : index
    %c0_66 = arith.constant 0 : index
    %113 = vector.load %arg7[%c0_64, %c3, %c0_65, %c0_66] : memref<1x4x8x8xf32, #tpu.memory_space<vmem>>, vector<1x1x8x8xf32>
    %114 = vector.shape_cast %113 : vector<1x1x8x8xf32> to vector<8x8xf32>
    %115 = vector.shape_cast %112 : vector<8x8xf32> to vector<1x1x8x8xf32>
    tpu.vector_store %arg7[%c0_64, %c3, %c0_65, %c0_66], %115 {strides = array<i32>} : memref<1x4x8x8xf32, #tpu.memory_space<vmem>>, vector<1x1x8x8xf32>,
    %cst_67 = arith.constant dense<0.000000e+00> : vector<8x8xf32>
    %116 = tpu.matmul %112, %95, %cst_67 {dimension_numbers = #tpu.dot_dimension_numbers<[1], [0], [0], [1], [0, 0, 1, 1], [], []>} : vector<8x8xf32>, vector<8x8xf32>, vector<8x8xf32> -> vector<8x8xf32>
    %117 = tpu.concatenate %29, %58, %87, %116 in 1 : vector<8x8xf32>, vector<8x8xf32>, vector<8x8xf32>, vector<8x8xf32> -> vector<8x32xf32>
    %c0_68 = arith.constant 0 : index
    %c0_69 = arith.constant 0 : index
    %c0_70 = arith.constant 0 : index
    %118 = vector.load %arg6[%c0_68, %c0_69, %c0_70] : memref<1x8x32xf32, #tpu.memory_space<vmem>>, vector<1x8x32xf32>
    %119 = vector.shape_cast %118 : vector<1x8x32xf32> to vector<8x32xf32>
    %120 = vector.shape_cast %117 : vector<8x32xf32> to vector<1x8x32xf32>
    tpu.vector_store %arg6[%c0_68, %c0_69, %c0_70], %120 {strides = array<i32>} : memref<1x8x32xf32, #tpu.memory_space<vmem>>, vector<1x8x32xf32>,
    return
  }
  func.func @transform_0(%arg0: i32, %arg1: i32, %arg2: i32) -> (i32, i32, i32) {
    %c0_i32 = arith.constant 0 : i32
    %0 = arith.addi %c0_i32, %arg1 : i32
    %c0_i32_0 = arith.constant 0 : i32
    return %arg0, %arg2, %0 : i32, i32, i32
  }
  func.func @transform_1(%arg0: i32, %arg1: i32, %arg2: i32) -> (i32, i32, i32) {
    %c0_i32 = arith.constant 0 : i32
    %0 = arith.addi %c0_i32, %arg1 : i32
    %c0_i32_0 = arith.constant 0 : i32
    %c0_i32_1 = arith.constant 0 : i32
    return %arg0, %c0_i32_0, %0 : i32, i32, i32
  }
  func.func @transform_2(%arg0: i32, %arg1: i32, %arg2: i32) -> (i32, i32, i32) {
    %c0_i32 = arith.constant 0 : i32
    %0 = arith.addi %c0_i32, %arg1 : i32
    %c0_i32_0 = arith.constant 0 : i32
    %c0_i32_1 = arith.constant 0 : i32
    return %arg0, %c0_i32_0, %0 : i32, i32, i32
  }
  func.func @transform_3(%arg0: i32, %arg1: i32, %arg2: i32) -> (i32, i32, i32) {
    %c0_i32 = arith.constant 0 : i32
    return %arg0, %arg2, %arg1 : i32, i32, i32
  }
  func.func @transform_4(%arg0: i32, %arg1: i32, %arg2: i32) -> (i32, i32, i32, i32) {
    %c0_i32 = arith.constant 0 : i32
    %c0_i32_0 = arith.constant 0 : i32
    return %arg0, %arg1, %arg2, %c0_i32 : i32, i32, i32, i32
  }
}

</mosaic_0001>

<llo_original>
// kernel: gpt2_attention_forward.5
$region0: #{gpt2_attention_forward.5}
  #allocation0 [shape = 'u32[]', space=smem, size = 0x4, offset = 0x4, fixed_abs, tag = 'smem constant byte address 0x4 - core index']
  #allocation1 [shape = 'u32[72,128]{1,0:T(1,128)}', space=vmem, size = 0x9000, scoped, tag = 'internal scratch']
  %s0 = inlined_call_operand.vmem [shape: f32[16,32], index: 0, kind: input, shape index: {}]
  %s1 = inlined_call_operand.vmem [shape: f32[32,32], index: 1, kind: input, shape index: {}]
  %s2 = inlined_call_operand.vmem [shape: f32[1,32], index: 2, kind: input, shape index: {}]
  %s3 = inlined_call_operand.hbm [shape: f32[16,32], index: 3, kind: output, shape index: {}]
  %s4 = sld [smem:[#allocation0]]
  $region22: #{gpt2_attention_forward.5} parent=0
    _
  %s6 = ssub.s32 1, %s4
  %s7 = scalar_select 0, %s6, %s4
  $region1: #{gpt2_attention_forward.5} parent=0
    #allocation2 [shape = 'u8[8192]{0}', space=vmem, size = 0x2000, scoped, tag = 'output window, operand 0, single buffered']
    #allocation3 [shape = 's32[1]{0}', space=sflag, size = 0x4, scoped, tag = 'scoped memory for gpt2_attention_forward.5']
    %8 = vsyncpa [#allocation3], 0
    // Predicated region
    $region2: #{gpt2_attention_forward.5} parent=1 // pred_check
      _
    $region3: #{gpt2_attention_forward.5} parent=1 // pred_check_branch
      %10 = sbr.rel (0) target = $region5
    $region4: #{gpt2_attention_forward.5} parent=1 // pred_region
      _
    $region5: #{gpt2_attention_forward.5} parent=1 // pred_fallthru
      _
    // Predicated region
    $region6: #{gpt2_attention_forward.5} parent=1 // pred_check
      _
    $region7: #{gpt2_attention_forward.5} parent=1 // pred_check_branch
      %12 = sbr.rel (0) target = $region9
    $region8: #{gpt2_attention_forward.5} parent=1 // pred_region
      _
    $region9: #{gpt2_attention_forward.5} parent=1 // pred_fallthru
      _
    // Predicated region
    $region10: #{gpt2_attention_forward.5} parent=1 // pred_check
      _
    $region11: #{gpt2_attention_forward.5} parent=1 // pred_check_branch
      %14 = sbr.rel (0) target = $region13
    $region12: #{gpt2_attention_forward.5} parent=1 // pred_region
      _
    $region13: #{gpt2_attention_forward.5} parent=1 // pred_fallthru
      _
    %v15 = vld [vmem:[%s0] sm:$0xff]
    %v16 = vld [vmem:[%s0 + $0x8] sm:$0xff]
    %v17 = vld [vmem:[%s1] sm:$0xff]
    %v18 = vld [vmem:[%s1 + $0x8] sm:$0xff]
    %v19 = vld [vmem:[%s1 + $0x10] sm:$0xff]
    %v20 = vld [vmem:[%s1 + $0x18] sm:$0xff]
    %v21 = vld [vmem:[%s2] sm:$0x1]
    %v23 = vperm.slane %v21, 0
    %vm25 = vcmask 261120
    %v27 = vsel %vm25, %v15, 0
    %v30 = vsel %vm25, %v16, 0
    %32 = vmatpush.msra.mxu0 0.0
    %33 = vmatpush.msra.mxu0 0.0
    %34 = vmatpush.msra.mxu0 0.0
    %35 = vmatpush.msra.mxu0 0.0
    %36 = vmatpush.msra.mxu0 0.0
    %37 = vmatpush.msra.mxu0 0.0
    %38 = vmatpush.msra.mxu0 0.0
    %39 = vmatpush.msra.mxu0 0.0
    %40 = vmatpush.msra.mxu0 0.0
    %41 = vmatpush.msra.mxu0 0.0
    %42 = vmatpush.msra.mxu0 0.0
    %43 = vmatpush.msra.mxu0 0.0
    %44 = vmatpush.msra.mxu0 %v20
    %45 = vmatpush.msra.mxu0 %v19
    %46 = vmatpush.msra.mxu0 %v18
    %47 = vmatpush.msra.mxu0 %v17
    %48 = vmatmul.f32.gmra.mxu0 %v27
    %v49 = vpop.f32.mrf.mxu0
    %v50 = vadd.f32 %v23, %v49
    %51 = vmatmul.f32.gmra.mxu0 %v30
    %v52 = vpop.f32.mrf.mxu0
    %v53 = vadd.f32 %v23, %v52
    %54 = vdwg.mxu0
    %55 = vst.msk [vmem:[#allocation2] sm:$0xff] %vm25, %v50
    %56 = vst.msk [vmem:[#allocation2 + $0x8] sm:$0xff] %vm25, %v53
    // Predicated region
    $region14: #{gpt2_attention_forward.5} parent=1 // pred_check
      _
    $region15: #{gpt2_attention_forward.5} parent=1 // pred_check_branch
      %58 = sbr.rel (0) target = $region17
    $region16: #{gpt2_attention_forward.5} parent=1 // pred_region
      %60 = vsyncadd [#allocation3], 0
      %s61 = sshll.u32 [#allocation2], 4
      %s62 = int_to_ptr.vmem [resolvable:$true] %s61
      %s63 = sshll.u32 %s3, 4
      %s64 = int_to_ptr.hbm [resolvable:$true] %s63
      %69 = dma.vmem_to_hbm [thread:$0]  %s62, 256, %s64, [#allocation3], 128, 128, 8
    $region17: #{gpt2_attention_forward.5} parent=1 // pred_fallthru
      _
    // Predicated region
    $region18: #{gpt2_attention_forward.5} parent=1 // pred_check
      _
    $region19: #{gpt2_attention_forward.5} parent=1 // pred_check_branch
      %71 = sbr.rel (0) target = $region21
    $region20: #{gpt2_attention_forward.5} parent=1 // pred_region
      %73 = dma.done [#allocation3], 256
    $region21: #{gpt2_attention_forward.5} parent=1 // pred_fallthru
      _
    %74 = vsyncpa [#allocation3], 1

// kernel: gpt2_attention_forward.3
$region0: #{gpt2_attention_forward.3}
  #allocation0 [shape = 'u32[]', space=smem, size = 0x4, offset = 0x4, fixed_abs, tag = 'smem constant byte address 0x4 - core index']
  #allocation1 [shape = 'u32[72,128]{1,0:T(1,128)}', space=vmem, size = 0x9000, scoped, tag = 'internal scratch']
  %s0 = inlined_call_operand.hbm [shape: f32[16,32], index: 0, kind: input, shape index: {}]
  %s1 = inlined_call_operand.hbm [shape: f32[32,96], index: 1, kind: input, shape index: {}]
  %s2 = inlined_call_operand.vmem [shape: f32[1,96], index: 2, kind: input, shape index: {}]
  %s3 = inlined_call_operand.vmem [shape: f32[16,96], index: 3, kind: output, shape index: {}]
  %s4 = sld [smem:[#allocation0]]
  $region30: #{gpt2_attention_forward.3} parent=0
    _
  %s6 = ssub.s32 1, %s4
  %s7 = scalar_select 0, %s6, %s4
  $region1: #{gpt2_attention_forward.3} parent=0
    #allocation2 [shape = 'u8[8192]{0}', space=vmem, size = 0x2000, scoped, tag = 'input window, operand 0, single buffered']
    #allocation3 [shape = 's32[1]{0}', space=sflag, size = 0x4, scoped, tag = 'scoped memory for gpt2_attention_forward.3']
    #allocation4 [shape = 'u8[16384]{0}', space=vmem, size = 0x4000, scoped, tag = 'input window, operand 1, single buffered']
    #allocation5 [shape = 's32[1]{0}', space=sflag, size = 0x4, scoped, tag = 'scoped memory for gpt2_attention_forward.3']
    %8 = vsyncpa [#allocation3], 0
    %9 = vsyncpa [#allocation5], 0
    // Predicated region
    $region2: #{gpt2_attention_forward.3} parent=1 // pred_check
      _
    $region3: #{gpt2_attention_forward.3} parent=1 // pred_check_branch
      %11 = sbr.rel (0) target = $region5
    $region4: #{gpt2_attention_forward.3} parent=1 // pred_region
      %13 = vsyncadd [#allocation3], 0
      %s14 = sshll.u32 %s0, 4
      %s15 = int_to_ptr.hbm [resolvable:$true] %s14
      %s16 = sshll.u32 [#allocation2], 4
      %s17 = int_to_ptr.vmem [resolvable:$true] %s16
      %22 = dma.hbm_to_vmem [thread:$0]  %s15, 256, %s17, [#allocation3], 128, 128, 8
    $region5: #{gpt2_attention_forward.3} parent=1 // pred_fallthru
      _
    // Predicated region
    $region6: #{gpt2_attention_forward.3} parent=1 // pred_check
      _
    $region7: #{gpt2_attention_forward.3} parent=1 // pred_check_branch
      %24 = sbr.rel (0) target = $region9
    $region8: #{gpt2_attention_forward.3} parent=1 // pred_region
      %26 = vsyncadd [#allocation5], 0
      %s27 = sshll.u32 %s1, 4
      %s28 = int_to_ptr.hbm [resolvable:$true] %s27
      %s29 = sshll.u32 [#allocation4], 4
      %s30 = int_to_ptr.vmem [resolvable:$true] %s29
      %35 = dma.hbm_to_vmem [thread:$0]  %s28, 512, %s30, [#allocation5], 128, 128, 8
    $region9: #{gpt2_attention_forward.3} parent=1 // pred_fallthru
      _
    // Predicated region
    $region10: #{gpt2_attention_forward.3} parent=1 // pred_check
      _
    $region11: #{gpt2_attention_forward.3} parent=1 // pred_check_branch
      %37 = sbr.rel (0) target = $region13
    $region12: #{gpt2_attention_forward.3} parent=1 // pred_region
      _
    $region13: #{gpt2_attention_forward.3} parent=1 // pred_fallthru
      _
    // Predicated region
    $region14: #{gpt2_attention_forward.3} parent=1 // pred_check
      _
    $region15: #{gpt2_attention_forward.3} parent=1 // pred_check_branch
      %39 = sbr.rel (0) target = $region17
    $region16: #{gpt2_attention_forward.3} parent=1 // pred_region
      %41 = dma.done [#allocation3], 256
    $region17: #{gpt2_attention_forward.3} parent=1 // pred_fallthru
      _
    // Predicated region
    $region18: #{gpt2_attention_forward.3} parent=1 // pred_check
      _
    $region19: #{gpt2_attention_forward.3} parent=1 // pred_check_branch
      %43 = sbr.rel (0) target = $region21
    $region20: #{gpt2_attention_forward.3} parent=1 // pred_region
      %45 = dma.done [#allocation5], 512
    $region21: #{gpt2_attention_forward.3} parent=1 // pred_fallthru
      _
    %v46 = vld [vmem:[#allocation2] sm:$0xff]
    %v47 = vld [vmem:[#allocation2 + $0x8] sm:$0xff]
    %v48 = vld [vmem:[#allocation4] sm:$0xff]
    %v49 = vld [vmem:[#allocation4 + $0x8] sm:$0xff]
    %v50 = vld [vmem:[#allocation4 + $0x10] sm:$0xff]
    %v51 = vld [vmem:[#allocation4 + $0x18] sm:$0xff]
    %v52 = vld [vmem:[%s2] sm:$0x1]
    %v54 = vperm.slane %v52, 0
    %vm56 = vcmask 261120
    %v58 = vsel %vm56, %v46, 0
    %v61 = vsel %vm56, %v47, 0
    %63 = vmatpush.msra.mxu0 0.0
    %64 = vmatpush.msra.mxu0 0.0
    %65 = vmatpush.msra.mxu0 0.0
    %66 = vmatpush.msra.mxu0 0.0
    %67 = vmatpush.msra.mxu0 0.0
    %68 = vmatpush.msra.mxu0 0.0
    %69 = vmatpush.msra.mxu0 0.0
    %70 = vmatpush.msra.mxu0 0.0
    %71 = vmatpush.msra.mxu0 0.0
    %72 = vmatpush.msra.mxu0 0.0
    %73 = vmatpush.msra.mxu0 0.0
    %74 = vmatpush.msra.mxu0 0.0
    %75 = vmatpush.msra.mxu0 %v51
    %76 = vmatpush.msra.mxu0 %v50
    %77 = vmatpush.msra.mxu0 %v49
    %78 = vmatpush.msra.mxu0 %v48
    %79 = vmatmul.f32.gmra.mxu0 %v58
    %v80 = vpop.f32.mrf.mxu0
    %v81 = vadd.f32 %v54, %v80
    %82 = vmatmul.f32.gmra.mxu0 %v61
    %v83 = vpop.f32.mrf.mxu0
    %v84 = vadd.f32 %v54, %v83
    %85 = vdwg.mxu0
    %vm86 = vcmask 785408
    %87 = vst.msk [vmem:[%s3] sm:$0xff] %vm86, %v81
    %88 = vst.msk [vmem:[%s3 + $0x8] sm:$0xff] %vm86, %v84
    // Predicated region
    $region22: #{gpt2_attention_forward.3} parent=1 // pred_check
      _
    $region23: #{gpt2_attention_forward.3} parent=1 // pred_check_branch
      %90 = sbr.rel (0) target = $region25
    $region24: #{gpt2_attention_forward.3} parent=1 // pred_region
      _
    $region25: #{gpt2_attention_forward.3} parent=1 // pred_fallthru
      _
    // Predicated region
    $region26: #{gpt2_attention_forward.3} parent=1 // pred_check
      _
    $region27: #{gpt2_attention_forward.3} parent=1 // pred_check_branch
      %92 = sbr.rel (0) target = $region29
    $region28: #{gpt2_attention_forward.3} parent=1 // pred_region
      _
    $region29: #{gpt2_attention_forward.3} parent=1 // pred_fallthru
      _
    %93 = vsyncpa [#allocation3], 1
    %94 = vsyncpa [#allocation5], 1

// kernel: gpt2_attention_forward.4
$region0: #{gpt2_attention_forward.4}
  #allocation0 [shape = 'u32[]', space=smem, size = 0x4, offset = 0x4, fixed_abs, tag = 'smem constant byte address 0x4 - core index']
  #allocation1 [shape = 'u32[72,128]{1,0:T(1,128)}', space=vmem, size = 0x9000, scoped, tag = 'internal scratch']
  %s0 = inlined_call_operand.vmem [shape: f32[2,8,32], index: 0, kind: input, shape index: {}]
  %s1 = inlined_call_operand.vmem [shape: f32[2,8,32], index: 1, kind: input, shape index: {}]
  %s2 = inlined_call_operand.vmem [shape: f32[2,8,32], index: 2, kind: input, shape index: {}]
  %s3 = inlined_call_operand.vmem [shape: f32[2,8,32], index: 3, kind: output, shape index: {0}]
  %s4 = inlined_call_operand.hbm [shape: f32[2,4,8,8], index: 4, kind: output, shape index: {1}]
  %5 = xla_tuple %s3, %s4
  %s6 = sld [smem:[#allocation0]]
  $region53: #{gpt2_attention_forward.4} parent=0
    _
  %s8 = ssub.s32 1, %s6
  %s9 = scalar_select 0, %s8, %s6
  $region1: #{gpt2_attention_forward.4} parent=0
    #allocation2 [shape = 'u8[32768]{0}', space=vmem, size = 0x8000, scoped, tag = 'output window, operand 1']
    #allocation3 [shape = 's32[2]{0}', space=sflag, size = 0x8, scoped, tag = 'scoped memory for gpt2_attention_forward.4']
    %10 = vsyncpa [#allocation3], 0
    %s11 = scalar_lea.sflag [#allocation3], 1
    %12 = vsyncpa %s11, 0
    loop: start=0, step=1, limit=4
    $region2: #{gpt2_attention_forward.4} parent=1 // loop_pre_header
      _
    $region3: #{gpt2_attention_forward.4} parent=1 // loop_header
      %s14 = sphi 0, %s18
      %p15 = scmp.ge.s32.totalorder %s14, 4
      %s21 = sphi 0, %s40
      %s22 = sphi 0, %s36
      %s23 = sphi 0, %s32
      %s24 = sphi 0, %s21
      %s25 = sphi 0, %s22
      %s26 = sphi 0, %s23
      %s27 = sphi 0, %s24
      %s28 = sphi 0, %s25
      %s29 = sphi 0, %s26
      %s47 = sphi 0, %s49
      %s50 = sphi 0, %s47
      %s51 = sphi 0, %s50
      %s67 = sphi 0, %s51
      %s75 = sphi 0, %s77
      %s78 = sphi 0, %s75
      %s79 = sphi 0, %s78
      %s95 = sphi 0, %s79
      %s103 = sphi 0, %s105
      %s106 = sphi 0, %s103
      %s107 = sphi 0, %s106
      %s123 = sphi 0, %s107
      %s133 = sphi 0, %s135
      %s136 = sphi 0, %s133
      %s137 = sphi 0, %s136
      %s153 = sphi 0, %s137
      %s163 = sphi 0, %s165
      %s166 = sphi 0, %s163
      %s167 = sphi 0, %s166
      %s183 = sphi 0, %s167
    $region4: #{gpt2_attention_forward.4} parent=1 // loop_header_branch
      %17 = sbr.rel (%p15) target = $region8
    $region5: #{gpt2_attention_forward.4} parent=1 // loop_body
      %s19 = ssub.s32 %s14, 1
      %s20 = ssub.s32 %s14, 2
      %s30 = sadd.s32 1, %s23
      %p31 = scmp.ge.s32.totalorder %s30, 1
      %s32 = scalar_select %p31, 0, %s30
      %s33 = sadd.s32 1, %s22
      %s34 = scalar_select %p31, %s33, %s22
      %p35 = scmp.ge.s32.totalorder %s34, 1
      %s36 = scalar_select %p35, 0, %s34
      %s37 = sadd.s32 1, %s21
      %s38 = scalar_select %p35, %s37, %s21
      %p39 = scmp.ge.s32.totalorder %s38, 2
      %s40 = scalar_select %p39, 0, %s38
      %s41 = ssub.s32 %s21, %s40
      %s42 = ssub.s32 %s23, %s32
      %s43 = sor.u32 %s41, %s42
      %s44 = ssub.s32 %s22, %s36
      %s45 = sor.u32 %s43, %s44
      %p46 = scmp.eq.s32.totalorder %s45, 0
      %s48 = sadd.s32 %s47, 1
      %s49 = scalar_select %p46, %s47, %s48
      %p52 = pneg %p46
      %p53 = scmp.eq.s32.totalorder %s14, 1
      %p54 = por %p52, %p53
      %p55 = scmp.ne.s32.totalorder %s47, %s50
      %p56 = scmp.eq.s32.totalorder %s14, 0
      %p57 = por %p55, %p56
      %p58 = scmp.ne.s32.totalorder %s47, %s50
      %p59 = scmp.eq.s32.totalorder %s19, 1
      %p60 = por %p58, %p59
      %p61 = scmp.ne.s32.totalorder %s50, %s51
      %p62 = scmp.eq.s32.totalorder %s19, 0
      %p63 = por %p61, %p62
      %p64 = scmp.ne.s32.totalorder %s50, %s51
      %p65 = scmp.eq.s32.totalorder %s20, 1
      %p66 = por %p64, %p65
      %p68 = scmp.ne.s32.totalorder %s51, %s67
      %p69 = scmp.eq.s32.totalorder %s20, 0
      %p70 = por %p68, %p69
      %s71 = ssub.s32 %s21, %s40
      %s72 = ssub.s32 %s22, %s36
      %s73 = sor.u32 %s71, %s72
      %p74 = scmp.eq.s32.totalorder %s73, 0
      %s76 = sadd.s32 %s75, 1
      %s77 = scalar_select %p74, %s75, %s76
      %p80 = pneg %p74
      %p81 = scmp.eq.s32.totalorder %s14, 1
      %p82 = por %p80, %p81
      %p83 = scmp.ne.s32.totalorder %s75, %s78
      %p84 = scmp.eq.s32.totalorder %s14, 0
      %p85 = por %p83, %p84
      %p86 = scmp.ne.s32.totalorder %s75, %s78
      %p87 = scmp.eq.s32.totalorder %s19, 1
      %p88 = por %p86, %p87
      %p89 = scmp.ne.s32.totalorder %s78, %s79
      %p90 = scmp.eq.s32.totalorder %s19, 0
      %p91 = por %p89, %p90
      %p92 = scmp.ne.s32.totalorder %s78, %s79
      %p93 = scmp.eq.s32.totalorder %s20, 1
      %p94 = por %p92, %p93
      %p96 = scmp.ne.s32.totalorder %s79, %s95
      %p97 = scmp.eq.s32.totalorder %s20, 0
      %p98 = por %p96, %p97
      %s99 = ssub.s32 %s21, %s40
      %s100 = ssub.s32 %s22, %s36
      %s101 = sor.u32 %s99, %s100
      %p102 = scmp.eq.s32.totalorder %s101, 0
      %s104 = sadd.s32 %s103, 1
      %s105 = scalar_select %p102, %s103, %s104
      %p108 = pneg %p102
      %p109 = scmp.eq.s32.totalorder %s14, 1
      %p110 = por %p108, %p109
      %p111 = scmp.ne.s32.totalorder %s103, %s106
      %p112 = scmp.eq.s32.totalorder %s14, 0
      %p113 = por %p111, %p112
      %p114 = scmp.ne.s32.totalorder %s103, %s106
      %p115 = scmp.eq.s32.totalorder %s19, 1
      %p116 = por %p114, %p115
      %p117 = scmp.ne.s32.totalorder %s106, %s107
      %p118 = scmp.eq.s32.totalorder %s19, 0
      %p119 = por %p117, %p118
      %p120 = scmp.ne.s32.totalorder %s106, %s107
      %p121 = scmp.eq.s32.totalorder %s20, 1
      %p122 = por %p120, %p121
      %p124 = scmp.ne.s32.totalorder %s107, %s123
      %p125 = scmp.eq.s32.totalorder %s20, 0
      %p126 = por %p124, %p125
      %s127 = ssub.s32 %s21, %s40
      %s128 = ssub.s32 %s23, %s32
      %s129 = sor.u32 %s127, %s128
      %s130 = ssub.s32 %s22, %s36
      %s131 = sor.u32 %s129, %s130
      %p132 = scmp.eq.s32.totalorder %s131, 0
      %s134 = sadd.s32 %s133, 1
      %s135 = scalar_select %p132, %s133, %s134
      %p138 = pneg %p132
      %p139 = scmp.eq.s32.totalorder %s14, 1
      %p140 = por %p138, %p139
      %p141 = scmp.ne.s32.totalorder %s133, %s136
      %p142 = scmp.eq.s32.totalorder %s14, 0
      %p143 = por %p141, %p142
      %p144 = scmp.ne.s32.totalorder %s133, %s136
      %p145 = scmp.eq.s32.totalorder %s19, 1
      %p146 = por %p144, %p145
      %p147 = scmp.ne.s32.totalorder %s136, %s137
      %p148 = scmp.eq.s32.totalorder %s19, 0
      %p149 = por %p147, %p148
      %p150 = scmp.ne.s32.totalorder %s136, %s137
      %p151 = scmp.eq.s32.totalorder %s20, 1
      %p152 = por %p150, %p151
      %p154 = scmp.ne.s32.totalorder %s137, %s153
      %p155 = scmp.eq.s32.totalorder %s20, 0
      %p156 = por %p154, %p155
      %s157 = ssub.s32 %s21, %s40
      %s158 = ssub.s32 %s22, %s36
      %s159 = sor.u32 %s157, %s158
      %s160 = ssub.s32 %s23, %s32
      %s161 = sor.u32 %s159, %s160
      %p162 = scmp.eq.s32.totalorder %s161, 0
      %s164 = sadd.s32 %s163, 1
      %s165 = scalar_select %p162, %s163, %s164
      %p168 = pneg %p162
      %p169 = scmp.eq.s32.totalorder %s14, 1
      %p170 = por %p168, %p169
      %p171 = scmp.ne.s32.totalorder %s163, %s166
      %p172 = scmp.eq.s32.totalorder %s14, 0
      %p173 = por %p171, %p172
      %p174 = scmp.ne.s32.totalorder %s163, %s166
      %p175 = scmp.eq.s32.totalorder %s19, 1
      %p176 = por %p174, %p175
      %p177 = scmp.ne.s32.totalorder %s166, %s167
      %p178 = scmp.eq.s32.totalorder %s19, 0
      %p179 = por %p177, %p178
      %p180 = scmp.ne.s32.totalorder %s166, %s167
      %p181 = scmp.eq.s32.totalorder %s20, 1
      %p182 = por %p180, %p181
      %p184 = scmp.ne.s32.totalorder %s167, %s183
      %p185 = scmp.eq.s32.totalorder %s20, 0
      %p186 = por %p184, %p185
      %p187 = scmp.le.s32.totalorder 1, %s14
      %p188 = scmp.lt.s32.totalorder %s14, 3
      %p189 = pnand %p187, %p188
      %p190 = pneg %p189
      // Predicated region
      $region9: #{gpt2_attention_forward.4} parent=5 // pred_check
        _
      $region10: #{gpt2_attention_forward.4} parent=5 // pred_check_branch
        %192 = sbr.rel (%p189) target = $region12
      $region11: #{gpt2_attention_forward.4} parent=5 // pred_region
        %s193 = ssub.s32 %s14, 1
      $region12: #{gpt2_attention_forward.4} parent=5 // pred_fallthru
        _
      %p194 = scmp.lt.s32.totalorder %s14, 2
      // Predicated region
      $region13: #{gpt2_attention_forward.4} parent=5 // pred_check
        %p195 = pneg %p194
      $region14: #{gpt2_attention_forward.4} parent=5 // pred_check_branch
        %197 = sbr.rel (%p195) target = $region16
      $region15: #{gpt2_attention_forward.4} parent=5 // pred_region
        // Predicated region
        $region17: #{gpt2_attention_forward.4} parent=15 // pred_check
          %p198 = pneg %p57
        $region18: #{gpt2_attention_forward.4} parent=15 // pred_check_branch
          %200 = sbr.rel (%p198) target = $region20
        $region19: #{gpt2_attention_forward.4} parent=15 // pred_region
          %p201 = scmp.lt.s32.totalorder %s21, 1
          %s202 = scalar_select %p201, %s21, 1
          %p203 = scmp.lt.s32.totalorder %s23, 0
          %s204 = scalar_select %p203, %s23, 0
          %p205 = scmp.lt.s32.totalorder %s22, 0
          %s206 = scalar_select %p205, %s22, 0
          %s207 = sadd.s32 %s206, %s204
          %s208 = sadd.s32 %s207, %s202
          %s209 = smul.addr %s208, 8
          %s210 = scalar_lea.vmem %s0, %s209
        $region20: #{gpt2_attention_forward.4} parent=15 // pred_fallthru
          _
        // Predicated region
        $region21: #{gpt2_attention_forward.4} parent=15 // pred_check
          %p211 = pneg %p85
        $region22: #{gpt2_attention_forward.4} parent=15 // pred_check_branch
          %213 = sbr.rel (%p211) target = $region24
        $region23: #{gpt2_attention_forward.4} parent=15 // pred_region
          %p214 = scmp.lt.s32.totalorder %s21, 1
          %s215 = scalar_select %p214, %s21, 1
          %p216 = scmp.lt.s32.totalorder %s22, 0
          %s217 = scalar_select %p216, %s22, 0
          %s218 = sadd.s32 %s217, %s215
          %s219 = smul.addr %s218, 8
          %s220 = scalar_lea.vmem %s1, %s219
        $region24: #{gpt2_attention_forward.4} parent=15 // pred_fallthru
          _
        // Predicated region
        $region25: #{gpt2_attention_forward.4} parent=15 // pred_check
          %p221 = pneg %p113
        $region26: #{gpt2_attention_forward.4} parent=15 // pred_check_branch
          %223 = sbr.rel (%p221) target = $region28
        $region27: #{gpt2_attention_forward.4} parent=15 // pred_region
          %p224 = scmp.lt.s32.totalorder %s21, 1
          %s225 = scalar_select %p224, %s21, 1
          %p226 = scmp.lt.s32.totalorder %s22, 0
          %s227 = scalar_select %p226, %s22, 0
          %s228 = sadd.s32 %s227, %s225
          %s229 = smul.addr %s228, 8
          %s230 = scalar_lea.vmem %s2, %s229
        $region28: #{gpt2_attention_forward.4} parent=15 // pred_fallthru
          _
      $region16: #{gpt2_attention_forward.4} parent=5 // pred_fallthru
        _
      %p231 = scmp.le.s32.totalorder 1, %s14
      %p232 = scmp.lt.s32.totalorder %s14, 3
      %p233 = pnand %p231, %p232
      %p234 = pneg %p233
      // Predicated region
      $region29: #{gpt2_attention_forward.4} parent=5 // pred_check
        _
      $region30: #{gpt2_attention_forward.4} parent=5 // pred_check_branch
        %236 = sbr.rel (%p233) target = $region32
      $region31: #{gpt2_attention_forward.4} parent=5 // pred_region
        %s237 = ssub.s32 %s14, 1
        %p238 = scmp.lt.s32.totalorder %s24, 1
        %s239 = scalar_select %p238, %s24, 1
        %p240 = scmp.lt.s32.totalorder %s26, 0
        %s241 = scalar_select %p240, %s26, 0
        %p242 = scmp.lt.s32.totalorder %s25, 0
        %s243 = scalar_select %p242, %s25, 0
        %s244 = sadd.s32 %s243, %s241
        %s245 = sadd.s32 %s244, %s239
        %s246 = smul.addr %s245, 8
        %s247 = scalar_lea.vmem %s0, %s246
        %p248 = pneg %p63
        %p249 = pneg %p60
        %p250 = scmp.lt.s32.totalorder %s24, 1
        %s251 = scalar_select %p250, %s24, 1
        %p252 = scmp.lt.s32.totalorder %s25, 0
        %s253 = scalar_select %p252, %s25, 0
        %s254 = sadd.s32 %s253, %s251
        %s255 = smul.addr %s254, 8
        %s256 = scalar_lea.vmem %s1, %s255
        %p257 = pneg %p91
        %p258 = pneg %p88
        %p259 = scmp.lt.s32.totalorder %s24, 1
        %s260 = scalar_select %p259, %s24, 1
        %p261 = scmp.lt.s32.totalorder %s25, 0
        %s262 = scalar_select %p261, %s25, 0
        %s263 = sadd.s32 %s262, %s260
        %s264 = smul.addr %s263, 8
        %s265 = scalar_lea.vmem %s2, %s264
        %p266 = pneg %p119
        %p267 = pneg %p116
        %p268 = pneg %p149
        %p269 = pneg %p146
        %p270 = scmp.lt.s32.totalorder %s24, 1
        %s271 = scalar_select %p270, %s24, 1
        %p272 = scmp.lt.s32.totalorder %s26, 0
        %s273 = scalar_select %p272, %s26, 0
        %p274 = scmp.lt.s32.totalorder %s25, 0
        %s275 = scalar_select %p274, %s25, 0
        %s276 = sadd.s32 %s275, %s273
        %s277 = sadd.s32 %s276, %s271
        %s278 = smul.addr %s277, 8
        %s279 = scalar_lea.vmem %s3, %s278
        %p280 = pneg %p179
        %p281 = pneg %p176
        %s282 = sand.u32 %s166, 1
        %s283 = scalar_lea.sflag [#allocation3], %s282
        %s284 = sand.u32 %s166, 1
        %s285 = smul.addr %s284, 32
        %s286 = scalar_lea.vmem [#allocation2], %s285
        %p287 = scmp.lt.s32.totalorder %s24, 1
        %s288 = scalar_select %p287, %s24, 1
        %p289 = scmp.lt.s32.totalorder %s26, 0
        %s290 = scalar_select %p289, %s26, 0
        %p291 = scmp.lt.s32.totalorder %s25, 0
        %s292 = scalar_select %p291, %s25, 0
        %s293 = sadd.s32 %s292, %s290
        %s294 = sadd.s32 %s293, %s288
        %s295 = smul.addr %s294, 8
        %s296 = scalar_lea.vmem %s0, %s295
        %p297 = scmp.lt.s32.totalorder %s24, 1
        %s298 = scalar_select %p297, %s24, 1
        %p299 = scmp.lt.s32.totalorder %s25, 0
        %s300 = scalar_select %p299, %s25, 0
        %s301 = sadd.s32 %s300, %s298
        %s302 = smul.addr %s301, 8
        %s303 = scalar_lea.vmem %s1, %s302
        %p304 = scmp.lt.s32.totalorder %s24, 1
        %s305 = scalar_select %p304, %s24, 1
        %p306 = scmp.lt.s32.totalorder %s25, 0
        %s307 = scalar_select %p306, %s25, 0
        %s308 = sadd.s32 %s307, %s305
        %s309 = smul.addr %s308, 8
        %s310 = scalar_lea.vmem %s2, %s309
        %p311 = scmp.lt.s32.totalorder %s24, 1
        %s312 = scalar_select %p311, %s24, 1
        %p313 = scmp.lt.s32.totalorder %s26, 0
        %s314 = scalar_select %p313, %s26, 0
        %p315 = scmp.lt.s32.totalorder %s25, 0
        %s316 = scalar_select %p315, %s25, 0
        %s317 = sadd.s32 %s316, %s314
        %s318 = sadd.s32 %s317, %s312
        %s319 = smul.addr %s318, 8
        %s320 = scalar_lea.vmem %s3, %s319
        %s321 = smul.u32 4, %s25
        %s322 = smul.u32 %s26, 8
        %v323 = vld [vmem:[%s296] sm:$0xff]
        %v324 = vmul.f32 %v323, 0.35355338
        %v325 = vld [vmem:[%s303] sm:$0xff]
        %v326 = vld [vmem:[%s310] sm:$0xff]
        %vm327 = vcmask 64512
        %v329 = vsel %vm327, %v324, 0
        %v332 = vsel %vm327, %v325, 0
        %334 = vmatpush.xpose.msra.mxu0 0.0
        %335 = vmatpush.xpose.msra.mxu0 0.0
        %336 = vmatpush.xpose.msra.mxu0 0.0
        %337 = vmatpush.xpose.msra.mxu0 0.0
        %338 = vmatpush.xpose.msra.mxu0 0.0
        %339 = vmatpush.xpose.msra.mxu0 0.0
        %340 = vmatpush.xpose.msra.mxu0 0.0
        %341 = vmatpush.xpose.msra.mxu0 0.0
        %342 = vmatpush.xpose.msra.mxu0 0.0
        %343 = vmatpush.xpose.msra.mxu0 0.0
        %344 = vmatpush.xpose.msra.mxu0 0.0
        %345 = vmatpush.xpose.msra.mxu0 0.0
        %346 = vmatpush.xpose.msra.mxu0 0.0
        %347 = vmatpush.xpose.msra.mxu0 0.0
        %348 = vmatpush.xpose.msra.mxu0 0.0
        %349 = vmatpush.xpose.msra.mxu0 %v332
        %350 = vmatmul.f32.gmra.mxu0 %v329
        %v351 = vpop.f32.mrf.mxu0
        %v352 = vadd.f32 0.0, %v351
        %353 = vdwg.mxu0
        %v354 = vlaneseq
        %v355 = vshrl.u32 %v354, 7
        %v356 = vstv %s322
        %v357 = vadd.s32 %v356, %v355
        %v358 = vlaneseq
        %v359 = vand.u32 %v358, 127
        %vm360 = vcmp.ge.s32.totalorder %v357, %v359
        %v361 = vsel %vm360, %v352, -3.4028235e+38
        %v362 = vsel %vm327, %v361, -inf
        %363 = vmax.xlane.f32.xlu0 %v362
        %v364 = vpop.xlane.xlu0 %363
        %v365 = vsub.f32 %v361, %v364
        %v366 = vmul.f32 %v365, 1.442695
        %v367 = vpow.pop %v366
        %v368 = vsel %vm327, %v367, 0.0
        %369 = vadd.xlane.f32.xlu0 %v368
        %v370 = vpop.xlane.xlu0 %369
        %v371 = vrcp.pop %v370
        %v372 = vmul.f32 %v370, %v371
        %v373 = vsub.f32 1.0, %v372
        %v374 = vmul.f32 %v371, %v373
        %v375 = vadd.f32 %v371, %v374
        %vm376 = vweird.f32 %v370
        %vm377 = vweird.f32 %v371
        %vm378 = vmor %vm376, %vm377
        %v379 = vsel %vm378, %v371, %v375
        %v380 = vand.u32 2147483647, %v370
        %vm381 = vcmp.eq.f32.partialorder %v380, 8.507059e+37
        %v382 = vand.u32 %v370, 2147483648
        %v383 = vor.u32 1.1754944e-38, %v382
        %v384 = vsel %vm381, %v383, %v379
        %v385 = vmul.f32 %v367, %v384
        %386 = vst.msk [vmem:[%s286] sm:$0xff] %vm327, %v385
        %v388 = vsel %vm327, %v385, 0
        %390 = vmatpush.msra.mxu0 0.0
        %391 = vmatpush.msra.mxu0 0.0
        %392 = vmatpush.msra.mxu0 0.0
        %393 = vmatpush.msra.mxu0 0.0
        %394 = vmatpush.msra.mxu0 0.0
        %395 = vmatpush.msra.mxu0 0.0
        %396 = vmatpush.msra.mxu0 0.0
        %397 = vmatpush.msra.mxu0 0.0
        %398 = vmatpush.msra.mxu0 0.0
        %399 = vmatpush.msra.mxu0 0.0
        %400 = vmatpush.msra.mxu0 0.0
        %401 = vmatpush.msra.mxu0 0.0
        %402 = vmatpush.msra.mxu0 0.0
        %403 = vmatpush.msra.mxu0 0.0
        %404 = vmatpush.msra.mxu0 0.0
        %405 = vmatpush.msra.mxu0 %v326
        %406 = vmatmul.f32.gmra.mxu0 %v388
        %v407 = vpop.f32.mrf.mxu0
        %v408 = vadd.f32 0.0, %v407
        %409 = vdwg.mxu0
        %v410 = vld [vmem:[%s296] sm:$0xff]
        %v411 = vmul.f32 %v410, 0.35355338
        %v412 = vld [vmem:[%s303] sm:$0xff]
        %v413 = vld [vmem:[%s310] sm:$0xff]
        %415 = vrot.lane.b32.xlu0 %v411, 120
        %v416 = vpop.permute.xlu0 %415
        %418 = vrot.lane.b32.xlu0 %v412, 120
        %v419 = vpop.permute.xlu0 %418
        %v420 = vsel %vm327, %v416, 0
        %v422 = vsel %vm327, %v419, 0
        %424 = vmatpush.xpose.msra.mxu0 0.0
        %425 = vmatpush.xpose.msra.mxu0 0.0
        %426 = vmatpush.xpose.msra.mxu0 0.0
        %427 = vmatpush.xpose.msra.mxu0 0.0
        %428 = vmatpush.xpose.msra.mxu0 0.0
        %429 = vmatpush.xpose.msra.mxu0 0.0
        %430 = vmatpush.xpose.msra.mxu0 0.0
        %431 = vmatpush.xpose.msra.mxu0 0.0
        %432 = vmatpush.xpose.msra.mxu0 0.0
        %433 = vmatpush.xpose.msra.mxu0 0.0
        %434 = vmatpush.xpose.msra.mxu0 0.0
        %435 = vmatpush.xpose.msra.mxu0 0.0
        %436 = vmatpush.xpose.msra.mxu0 0.0
        %437 = vmatpush.xpose.msra.mxu0 0.0
        %438 = vmatpush.xpose.msra.mxu0 0.0
        %439 = vmatpush.xpose.msra.mxu0 %v422
        %440 = vmatmul.f32.gmra.mxu0 %v420
        %v441 = vpop.f32.mrf.mxu0
        %v442 = vadd.f32 0.0, %v441
        %443 = vdwg.mxu0
        %v444 = vsel %vm360, %v442, -3.4028235e+38
        %v445 = vsel %vm327, %v444, -inf
        %446 = vmax.xlane.f32.xlu0 %v445
        %v447 = vpop.xlane.xlu0 %446
        %v448 = vsub.f32 %v444, %v447
        %v449 = vmul.f32 %v448, 1.442695
        %v450 = vpow.pop %v449
        %v451 = vsel %vm327, %v450, 0.0
        %452 = vadd.xlane.f32.xlu0 %v451
        %v453 = vpop.xlane.xlu0 %452
        %v454 = vrcp.pop %v453
        %v455 = vmul.f32 %v453, %v454
        %v456 = vsub.f32 1.0, %v455
        %v457 = vmul.f32 %v454, %v456
        %v458 = vadd.f32 %v454, %v457
        %vm459 = vweird.f32 %v453
        %vm460 = vweird.f32 %v454
        %vm461 = vmor %vm459, %vm460
        %v462 = vsel %vm461, %v454, %v458
        %v463 = vand.u32 2147483647, %v453
        %vm464 = vcmp.eq.f32.partialorder %v463, 8.507059e+37
        %v465 = vand.u32 %v453, 2147483648
        %v466 = vor.u32 1.1754944e-38, %v465
        %v467 = vsel %vm464, %v466, %v462
        %v468 = vmul.f32 %v450, %v467
        %s469 = scalar_lea.vmem %s286, 8 [#allocation2]
        %470 = vst.msk [vmem:[%s469] sm:$0xff] %vm327, %v468
        %472 = vrot.lane.b32.xlu0 %v413, 120
        %v473 = vpop.permute.xlu0 %472
        %v476 = vsel %vm327, %v468, 0
        %478 = vmatpush.msra.mxu0 0.0
        %479 = vmatpush.msra.mxu0 0.0
        %480 = vmatpush.msra.mxu0 0.0
        %481 = vmatpush.msra.mxu0 0.0
        %482 = vmatpush.msra.mxu0 0.0
        %483 = vmatpush.msra.mxu0 0.0
        %484 = vmatpush.msra.mxu0 0.0
        %485 = vmatpush.msra.mxu0 0.0
        %486 = vmatpush.msra.mxu0 0.0
        %487 = vmatpush.msra.mxu0 0.0
        %488 = vmatpush.msra.mxu0 0.0
        %489 = vmatpush.msra.mxu0 0.0
        %490 = vmatpush.msra.mxu0 0.0
        %491 = vmatpush.msra.mxu0 0.0
        %492 = vmatpush.msra.mxu0 0.0
        %493 = vmatpush.msra.mxu0 %v473
        %494 = vmatmul.f32.gmra.mxu0 %v476
        %v495 = vpop.f32.mrf.mxu0
        %v496 = vadd.f32 0.0, %v495
        %497 = vdwg.mxu0
        %v498 = vld [vmem:[%s296] sm:$0xff]
        %v499 = vmul.f32 %v498, 0.35355338
        %v500 = vld [vmem:[%s303] sm:$0xff]
        %v501 = vld [vmem:[%s310] sm:$0xff]
        %503 = vrot.lane.b32.xlu0 %v499, 112
        %v504 = vpop.permute.xlu0 %503
        %506 = vrot.lane.b32.xlu0 %v500, 112
        %v507 = vpop.permute.xlu0 %506
        %v508 = vsel %vm327, %v504, 0
        %v510 = vsel %vm327, %v507, 0
        %512 = vmatpush.xpose.msra.mxu0 0.0
        %513 = vmatpush.xpose.msra.mxu0 0.0
        %514 = vmatpush.xpose.msra.mxu0 0.0
        %515 = vmatpush.xpose.msra.mxu0 0.0
        %516 = vmatpush.xpose.msra.mxu0 0.0
        %517 = vmatpush.xpose.msra.mxu0 0.0
        %518 = vmatpush.xpose.msra.mxu0 0.0
        %519 = vmatpush.xpose.msra.mxu0 0.0
        %520 = vmatpush.xpose.msra.mxu0 0.0
        %521 = vmatpush.xpose.msra.mxu0 0.0
        %522 = vmatpush.xpose.msra.mxu0 0.0
        %523 = vmatpush.xpose.msra.mxu0 0.0
        %524 = vmatpush.xpose.msra.mxu0 0.0
        %525 = vmatpush.xpose.msra.mxu0 0.0
        %526 = vmatpush.xpose.msra.mxu0 0.0
        %527 = vmatpush.xpose.msra.mxu0 %v510
        %528 = vmatmul.f32.gmra.mxu0 %v508
        %v529 = vpop.f32.mrf.mxu0
        %v530 = vadd.f32 0.0, %v529
        %531 = vdwg.mxu0
        %v532 = vsel %vm360, %v530, -3.4028235e+38
        %v533 = vsel %vm327, %v532, -inf
        %534 = vmax.xlane.f32.xlu0 %v533
        %v535 = vpop.xlane.xlu0 %534
        %v536 = vsub.f32 %v532, %v535
        %v537 = vmul.f32 %v536, 1.442695
        %v538 = vpow.pop %v537
        %v539 = vsel %vm327, %v538, 0.0
        %540 = vadd.xlane.f32.xlu0 %v539
        %v541 = vpop.xlane.xlu0 %540
        %v542 = vrcp.pop %v541
        %v543 = vmul.f32 %v541, %v542
        %v544 = vsub.f32 1.0, %v543
        %v545 = vmul.f32 %v542, %v544
        %v546 = vadd.f32 %v542, %v545
        %vm547 = vweird.f32 %v541
        %vm548 = vweird.f32 %v542
        %vm549 = vmor %vm547, %vm548
        %v550 = vsel %vm549, %v542, %v546
        %v551 = vand.u32 2147483647, %v541
        %vm552 = vcmp.eq.f32.partialorder %v551, 8.507059e+37
        %v553 = vand.u32 %v541, 2147483648
        %v554 = vor.u32 1.1754944e-38, %v553
        %v555 = vsel %vm552, %v554, %v550
        %v556 = vmul.f32 %v538, %v555
        %s557 = scalar_lea.vmem %s286, 16 [#allocation2]
        %558 = vst.msk [vmem:[%s557] sm:$0xff] %vm327, %v556
        %560 = vrot.lane.b32.xlu0 %v501, 112
        %v561 = vpop.permute.xlu0 %560
        %v564 = vsel %vm327, %v556, 0
        %566 = vmatpush.msra.mxu0 0.0
        %567 = vmatpush.msra.mxu0 0.0
        %568 = vmatpush.msra.mxu0 0.0
        %569 = vmatpush.msra.mxu0 0.0
        %570 = vmatpush.msra.mxu0 0.0
        %571 = vmatpush.msra.mxu0 0.0
        %572 = vmatpush.msra.mxu0 0.0
        %573 = vmatpush.msra.mxu0 0.0
        %574 = vmatpush.msra.mxu0 0.0
        %575 = vmatpush.msra.mxu0 0.0
        %576 = vmatpush.msra.mxu0 0.0
        %577 = vmatpush.msra.mxu0 0.0
        %578 = vmatpush.msra.mxu0 0.0
        %579 = vmatpush.msra.mxu0 0.0
        %580 = vmatpush.msra.mxu0 0.0
        %581 = vmatpush.msra.mxu0 %v561
        %582 = vmatmul.f32.gmra.mxu0 %v564
        %v583 = vpop.f32.mrf.mxu0
        %v584 = vadd.f32 0.0, %v583
        %585 = vdwg.mxu0
        %v586 = vld [vmem:[%s296] sm:$0xff]
        %v587 = vmul.f32 %v586, 0.35355338
        %v588 = vld [vmem:[%s303] sm:$0xff]
        %v589 = vld [vmem:[%s310] sm:$0xff]
        %591 = vrot.lane.b32.xlu0 %v587, 104
        %v592 = vpop.permute.xlu0 %591
        %594 = vrot.lane.b32.xlu0 %v588, 104
        %v595 = vpop.permute.xlu0 %594
        %v596 = vsel %vm327, %v592, 0
        %v598 = vsel %vm327, %v595, 0
        %600 = vmatpush.xpose.msra.mxu0 0.0
        %601 = vmatpush.xpose.msra.mxu0 0.0
        %602 = vmatpush.xpose.msra.mxu0 0.0
        %603 = vmatpush.xpose.msra.mxu0 0.0
        %604 = vmatpush.xpose.msra.mxu0 0.0
        %605 = vmatpush.xpose.msra.mxu0 0.0
        %606 = vmatpush.xpose.msra.mxu0 0.0
        %607 = vmatpush.xpose.msra.mxu0 0.0
        %608 = vmatpush.xpose.msra.mxu0 0.0
        %609 = vmatpush.xpose.msra.mxu0 0.0
        %610 = vmatpush.xpose.msra.mxu0 0.0
        %611 = vmatpush.xpose.msra.mxu0 0.0
        %612 = vmatpush.xpose.msra.mxu0 0.0
        %613 = vmatpush.xpose.msra.mxu0 0.0
        %614 = vmatpush.xpose.msra.mxu0 0.0
        %615 = vmatpush.xpose.msra.mxu0 %v598
        %616 = vmatmul.f32.gmra.mxu0 %v596
        %v617 = vpop.f32.mrf.mxu0
        %v618 = vadd.f32 0.0, %v617
        %619 = vdwg.mxu0
        %v620 = vsel %vm360, %v618, -3.4028235e+38
        %v621 = vsel %vm327, %v620, -inf
        %622 = vmax.xlane.f32.xlu0 %v621
        %v623 = vpop.xlane.xlu0 %622
        %v624 = vsub.f32 %v620, %v623
        %v625 = vmul.f32 %v624, 1.442695
        %v626 = vpow.pop %v625
        %v627 = vsel %vm327, %v626, 0.0
        %628 = vadd.xlane.f32.xlu0 %v627
        %v629 = vpop.xlane.xlu0 %628
        %v630 = vrcp.pop %v629
        %v631 = vmul.f32 %v629, %v630
        %v632 = vsub.f32 1.0, %v631
        %v633 = vmul.f32 %v630, %v632
        %v634 = vadd.f32 %v630, %v633
        %vm635 = vweird.f32 %v629
        %vm636 = vweird.f32 %v630
        %vm637 = vmor %vm635, %vm636
        %v638 = vsel %vm637, %v630, %v634
        %v639 = vand.u32 2147483647, %v629
        %vm640 = vcmp.eq.f32.partialorder %v639, 8.507059e+37
        %v641 = vand.u32 %v629, 2147483648
        %v642 = vor.u32 1.1754944e-38, %v641
        %v643 = vsel %vm640, %v642, %v638
        %v644 = vmul.f32 %v626, %v643
        %s645 = scalar_lea.vmem %s286, 24 [#allocation2]
        %646 = vst.msk [vmem:[%s645] sm:$0xff] %vm327, %v644
        %648 = vrot.lane.b32.xlu0 %v589, 104
        %v649 = vpop.permute.xlu0 %648
        %v652 = vsel %vm327, %v644, 0
        %654 = vmatpush.msra.mxu0 0.0
        %655 = vmatpush.msra.mxu0 0.0
        %656 = vmatpush.msra.mxu0 0.0
        %657 = vmatpush.msra.mxu0 0.0
        %658 = vmatpush.msra.mxu0 0.0
        %659 = vmatpush.msra.mxu0 0.0
        %660 = vmatpush.msra.mxu0 0.0
        %661 = vmatpush.msra.mxu0 0.0
        %662 = vmatpush.msra.mxu0 0.0
        %663 = vmatpush.msra.mxu0 0.0
        %664 = vmatpush.msra.mxu0 0.0
        %665 = vmatpush.msra.mxu0 0.0
        %666 = vmatpush.msra.mxu0 0.0
        %667 = vmatpush.msra.mxu0 0.0
        %668 = vmatpush.msra.mxu0 0.0
        %669 = vmatpush.msra.mxu0 %v649
        %670 = vmatmul.f32.gmra.mxu0 %v652
        %v671 = vpop.f32.mrf.mxu0
        %v672 = vadd.f32 0.0, %v671
        %673 = vdwg.mxu0
        %675 = vrot.lane.b32.xlu0 %v496, 8
        %v676 = vpop.permute.xlu0 %675
        %679 = vrot.lane.b32.xlu0 %v584, 16
        %v680 = vpop.permute.xlu0 %679
        %683 = vrot.lane.b32.xlu0 %v672, 24
        %v684 = vpop.permute.xlu0 %683
        %v686 = vsel %vm327, %v408, %v676
        %vm687 = vcmask 130048
        %v688 = vsel %vm687, %v686, %v680
        %vm689 = vcmask 195584
        %v690 = vsel %vm689, %v688, %v684
        %vm691 = vcmask 261120
        %692 = vst.msk [vmem:[%s320] sm:$0xff] %vm691, %v690
        %p693 = scmp.lt.s32.totalorder %s24, 1
        %s694 = scalar_select %p693, %s24, 1
        %p695 = scmp.lt.s32.totalorder %s26, 0
        %s696 = scalar_select %p695, %s26, 0
        %p697 = scmp.lt.s32.totalorder %s25, 0
        %s698 = scalar_select %p697, %s25, 0
        %s699 = sadd.s32 %s698, %s696
        %s700 = sadd.s32 %s699, %s694
        %s701 = smul.addr %s700, 8
        %s702 = scalar_lea.vmem %s3, %s701
        %s703 = sand.u32 %s166, 1
        %s704 = scalar_lea.sflag [#allocation3], %s703
        %s705 = sand.u32 %s166, 1
        %s706 = smul.addr %s705, 32
        %s707 = scalar_lea.vmem [#allocation2], %s706
        // Predicated region
        $region33: #{gpt2_attention_forward.4} parent=31 // pred_check
          %p708 = pneg %p146
        $region34: #{gpt2_attention_forward.4} parent=31 // pred_check_branch
          %710 = sbr.rel (%p708) target = $region36
        $region35: #{gpt2_attention_forward.4} parent=31 // pred_region
          _
        $region36: #{gpt2_attention_forward.4} parent=31 // pred_fallthru
          _
        // Predicated region
        $region37: #{gpt2_attention_forward.4} parent=31 // pred_check
          %p711 = pneg %p176
        $region38: #{gpt2_attention_forward.4} parent=31 // pred_check_branch
          %713 = sbr.rel (%p711) target = $region40
        $region39: #{gpt2_attention_forward.4} parent=31 // pred_region
          %s714 = smul.u32 4, %s25
          %716 = vsyncadd %s704, 0
          %s717 = sadd.s32 %s26, %s714
          %s718 = smul.addr %s24, 4
          %s719 = sadd.s32 %s717, %s718
          %s720 = smul.addr %s719, 8
          %s721 = scalar_lea.hbm %s4, %s720
          %s722 = sshll.u32 %s707, 4
          %s723 = int_to_ptr.vmem [resolvable:$true] %s722
          %s724 = sshll.u32 %s721, 4
          %s725 = int_to_ptr.hbm [resolvable:$true] %s724
          %730 = dma.vmem_to_hbm [thread:$0]  %s723, 512, %s725, %s704, 128, 128, 8
        $region40: #{gpt2_attention_forward.4} parent=31 // pred_fallthru
          _
      $region32: #{gpt2_attention_forward.4} parent=5 // pred_fallthru
        _
      %p731 = scmp.le.s32.totalorder 2, %s14
      // Predicated region
      $region41: #{gpt2_attention_forward.4} parent=5 // pred_check
        %p732 = pneg %p731
      $region42: #{gpt2_attention_forward.4} parent=5 // pred_check_branch
        %734 = sbr.rel (%p732) target = $region44
      $region43: #{gpt2_attention_forward.4} parent=5 // pred_region
        %s735 = ssub.s32 %s14, 2
        // Predicated region
        $region45: #{gpt2_attention_forward.4} parent=43 // pred_check
          %p736 = pneg %p152
        $region46: #{gpt2_attention_forward.4} parent=43 // pred_check_branch
          %738 = sbr.rel (%p736) target = $region48
        $region47: #{gpt2_attention_forward.4} parent=43 // pred_region
          %p739 = scmp.lt.s32.totalorder %s27, 1
          %s740 = scalar_select %p739, %s27, 1
          %p741 = scmp.lt.s32.totalorder %s29, 0
          %s742 = scalar_select %p741, %s29, 0
          %p743 = scmp.lt.s32.totalorder %s28, 0
          %s744 = scalar_select %p743, %s28, 0
          %s745 = sadd.s32 %s744, %s742
          %s746 = sadd.s32 %s745, %s740
          %s747 = smul.addr %s746, 8
          %s748 = scalar_lea.vmem %s3, %s747
        $region48: #{gpt2_attention_forward.4} parent=43 // pred_fallthru
          _
        // Predicated region
        $region49: #{gpt2_attention_forward.4} parent=43 // pred_check
          %p749 = pneg %p182
        $region50: #{gpt2_attention_forward.4} parent=43 // pred_check_branch
          %751 = sbr.rel (%p749) target = $region52
        $region51: #{gpt2_attention_forward.4} parent=43 // pred_region
          %s752 = sand.u32 %s167, 1
          %s753 = scalar_lea.sflag [#allocation3], %s752
          %s754 = sand.u32 %s167, 1
          %s755 = smul.addr %s754, 32
          %s756 = scalar_lea.vmem [#allocation2], %s755
          %758 = dma.done %s753, 512
        $region52: #{gpt2_attention_forward.4} parent=43 // pred_fallthru
          _
      $region44: #{gpt2_attention_forward.4} parent=5 // pred_fallthru
        _
    $region6: #{gpt2_attention_forward.4} parent=1 // loop_footer
      %s18 = sadd.s32 1, %s14
    $region7: #{gpt2_attention_forward.4} parent=1 // loop_footer_branch
      %13 = sbr.rel target = $region3
    $region8: #{gpt2_attention_forward.4} parent=1 // loop_exit
      _
    %759 = vsyncpa [#allocation3], 1
    %s760 = scalar_lea.sflag [#allocation3], 1
    %761 = vsyncpa %s760, 1

</llo_original>
